<compile_context>
chip_gen: v5e
topology: v5e:2x2
jax: 0.10.0
libtpu: 0.0.40
codegen_flags: <defaults>
</compile_context>

<pallas_src>
import jax
import jax.numpy as jnp
from jax.experimental import pallas as pl
from jax.experimental.pallas import tpu as pltpu


def _round_up(x, m):
    return (x + m - 1) // m * m


def _choose_tiling(n, max_tile=1024, min_tiles=2):
    """Pick (tile_n, num_tiles): tile_n a multiple of 8, <= max_tile, at least
    `min_tiles` tiles when the problem is big enough (v7x 2-TC balance), and
    minimal padding (e.g. N=768 -> (384, 2), zero padding)."""
    n8 = _round_up(max(n, 1), 8)
    lo = -(-n8 // max_tile)                  # enough tiles to respect max_tile
    if n8 >= 8 * min_tiles:
        lo = max(lo, min_tiles)              # >= 2 tiles so both v7x TCs work
    best = None
    for nt in range(lo, lo + 8):             # scan a few candidates
        tile = _round_up(-(-n8 // nt), 8)
        if tile > max_tile:
            continue
        pad = nt * tile - n
        if best is None or pad < best[1]:
            best = ((tile, nt), pad)
    return best[0]


def embedding_kernel(ids_ref, tok_tbl_ref, seg_tbl_ref, out_ref):
    """One grid step computes TN output rows.

    ids_ref:     (TN, 2)  int32  col 0 = token ids, col 1 = segment ids
    tok_tbl_ref: (V,  D)  token embedding table (f32 or bf16), VMEM-resident
    seg_tbl_ref: (NS, D)  segment ("channel") embedding table, VMEM-resident
    out_ref:     (TN, D)  token_emb + segment_emb
    """
    tn = ids_ref.shape[0]
    v, d = tok_tbl_ref.shape
    ns = seg_tbl_ref.shape[0]

    ids = ids_ref[...]              # (TN, 2)
    tok_ids = ids[:, 0:1]           # (TN, 1)
    seg_ids = ids[:, 1:2]           # (TN, 1)

    # Token gather as a one-hot MXU contraction over the V token columns only
    # (K = V, 128-lane aligned).  One-hot values are exactly 0/1, so casting
    # to the table dtype (bf16 tables -> native bf16 MXU path) keeps the
    # gather exact; out-of-range ids simply contribute zeros.
    col_iota = jax.lax.broadcasted_iota(jnp.int32, (tn, v), 1)
    one_hot = (col_iota == tok_ids).astype(tok_tbl_ref.dtype)
    tok_emb = jnp.dot(one_hot, tok_tbl_ref[...],
                      preferred_element_type=jnp.float32)       # (TN, D) f32

    # Segment embedding: NS is tiny (2), so a short statically-unrolled chain
    # of VPU selects over the (TN, D) tile is far cheaper than widening the
    # MXU contraction by NS ragged columns.
    seg_tbl = seg_tbl_ref[...].astype(jnp.float32)              # (NS, D)
    seg_emb = jnp.zeros((tn, d), jnp.float32)
    for s in range(ns):                                         # NS == 2
        seg_emb = jnp.where(seg_ids == s, seg_tbl[s:s + 1, :], seg_emb)

    out_ref[...] = (tok_emb + seg_emb).astype(out_ref.dtype)


def bert_embedding(input_ids, segment_ids, tok_table, seg_table, *,
                   max_tile_n=1024, out_dtype=None, vmem_limit_bytes=None):
    """Pallas-backed BERTEmbedding.forward: token_embed[ids] + channel_embed[segs].

    Pass bf16 tables (and optionally out_dtype=jnp.bfloat16) when downstream
    tolerates it: the one-hot contraction then runs on the native bf16 MXU
    path and HBM write traffic halves (biggest win on v5e).
    """
    assert tok_table.ndim == 2 and seg_table.ndim == 2
    assert tok_table.shape[1] == seg_table.shape[1]

    B, S = input_ids.shape
    V, D = tok_table.shape
    NS = seg_table.shape[0]
    N = B * S
    out_dtype = out_dtype if out_dtype is not None else tok_table.dtype

    tile_n, num_tiles = _choose_tiling(N, max_tile=max_tile_n)
    n_pad = tile_n * num_tiles

    # Fuse token ids + segment ids into one (n_pad, 2) int32 array: one small
    # lane-padded VMEM buffer / DMA per grid step instead of two.
    ids = jnp.stack(
        [input_ids.reshape(-1).astype(jnp.int32),
         segment_ids.reshape(-1).astype(jnp.int32)], axis=-1)   # (N, 2)
    ids = jnp.pad(ids, ((0, n_pad - N), (0, 0)))                # (n_pad, 2)

    cp_kwargs = dict(dimension_semantics=("parallel",))
    if vmem_limit_bytes is not None:
        # Raise the scoped VMEM limit only when a large resident table plus
        # double-buffered output tiles exceed the default (32 MiB on v6e/v7x,
        # 16 MiB on v5e).  Physical VMEM is 128 MiB on v5e/v6e but only
        # 64 MiB on v7x: cap requests around ~48 MiB there to leave headroom
        # for the one-hot/iota temporaries and output buffers.
        cp_kwargs["vmem_limit_bytes"] = vmem_limit_bytes

    out_flat = pl.pallas_call(
        embedding_kernel,
        out_shape=jax.ShapeDtypeStruct((n_pad, D), out_dtype),
        grid_spec=pltpu.PrefetchScalarGridSpec(
            num_scalar_prefetch=0,
            grid=(num_tiles,),
            in_specs=[
                # Fused (token, segment) id tile.
                pl.BlockSpec((tile_n, 2), lambda i: (i, 0)),
                # Tables are grid-invariant -> single-buffer them (no point
                # double-buffering a block whose index_map is constant).
                pl.BlockSpec((V, D), lambda i: (0, 0),
                             pipeline_mode=pl.Buffered(1)),
                pl.BlockSpec((NS, D), lambda i: (0, 0),
                             pipeline_mode=pl.Buffered(1)),
            ],
            out_specs=pl.BlockSpec((tile_n, D), lambda i: (i, 0)),
        ),
        compiler_params=pltpu.CompilerParams(**cp_kwargs),
    )(ids, tok_table, seg_table)

    return out_flat[:N].reshape(B, S, D)


if __name__ == "__main__":
    # Module hyper-params (small, synthetic).
    vocab_size = 512
    d_model = 128
    max_seq_length = 512          # pos_encoding is unused in forward
    num_segments = 2

    # Example shapes: N = 768 tokens -> 2 balanced tiles of 384, zero padding.
    batch, seq = 2, 384

    key = jax.random.PRNGKey(0)
    k_tok, k_seg, k_ids, k_sids = jax.random.split(key, 4)

    # Deterministic parameter init (nn.Embedding default: N(0, 1)); f32 tables
    # keep the self-test bit-exact vs. the gather reference.
    tok_table = jax.random.normal(k_tok, (vocab_size, d_model), jnp.float32)
    seg_table = jax.random.normal(k_seg, (num_segments, d_model), jnp.float32)

    input_ids = jax.random.randint(k_ids, (batch, seq), 0, vocab_size, jnp.int32)
    segment_ids = jax.random.randint(k_sids, (batch, seq), 0, num_segments, jnp.int32)

    out = bert_embedding(input_ids, segment_ids, tok_table, seg_table)
    out = jax.block_until_ready(out)

    # Pure-JAX reference: embedding gather + add.
    ref = (jnp.take(tok_table, input_ids, axis=0)
           + jnp.take(seg_table, segment_ids, axis=0))
    assert out.shape == (batch, seq, d_model)
    assert out.dtype == jnp.float32
    assert jnp.allclose(out, ref, atol=1e-5, rtol=1e-5)

    print("KERNEL_OK")
</pallas_src>

<mosaic_0001>
module attributes {stable_mosaic.version = 11 : i64} {
  func.func @embedding_kernel(%arg0: i32, %arg1: memref<384x2xi32, #tpu.memory_space<vmem>>, %arg2: memref<512x128xf32, #tpu.memory_space<vmem>>, %arg3: memref<2x128xf32, #tpu.memory_space<vmem>>, %arg4: memref<384x128xf32, #tpu.memory_space<vmem>>) attributes {dimension_semantics = [#tpu.dimension_semantics<parallel>], iteration_bounds = array<i64: 2>, scalar_prefetch = 0 : i64, scratch_operands = 0 : i64, tpu.core_type = #tpu.core_type<tc>, window_params = [{transform_indices = @transform_0, window_bounds = array<i64: 384, 2>}, {pipeline_mode = #tpu.pipeline_mode<synchronous>, transform_indices = @transform_1, window_bounds = array<i64: 512, 128>}, {pipeline_mode = #tpu.pipeline_mode<synchronous>, transform_indices = @transform_2, window_bounds = array<i64: 2, 128>}, {transform_indices = @transform_3, window_bounds = array<i64: 384, 128>}]} {
    %c0 = arith.constant 0 : index
    %c0_0 = arith.constant 0 : index
    %0 = vector.load %arg1[%c0, %c0_0] : memref<384x2xi32, #tpu.memory_space<vmem>>, vector<384x2xi32>
    %1 = vector.extract_strided_slice %0 {offsets = [0, 0], sizes = [384, 1], strides = [1, 1]} : vector<384x2xi32> to vector<384x1xi32>
    %2 = vector.extract_strided_slice %0 {offsets = [0, 1], sizes = [384, 1], strides = [1, 1]} : vector<384x2xi32> to vector<384x1xi32>
    %3 = tpu.iota {dimensions = array<i32: 1>} : vector<384x512xi32>
    %4 = vector.broadcast %1 : vector<384x1xi32> to vector<384x512xi32>
    %5 = arith.cmpi eq, %3, %4 : vector<384x512xi32>
    %6 = arith.extui %5 : vector<384x512xi1> to vector<384x512xi32>
    %7 = arith.sitofp %6 : vector<384x512xi32> to vector<384x512xf32>
    %c0_1 = arith.constant 0 : index
    %c0_2 = arith.constant 0 : index
    %8 = vector.load %arg2[%c0_1, %c0_2] : memref<512x128xf32, #tpu.memory_space<vmem>>, vector<512x128xf32>
    %cst = arith.constant dense<0.000000e+00> : vector<384x128xf32>
    %9 = tpu.matmul %7, %8, %cst {dimension_numbers = #tpu.dot_dimension_numbers<[1], [0], [0], [1], [0, 0, 1, 1], [], []>} : vector<384x512xf32>, vector<512x128xf32>, vector<384x128xf32> -> vector<384x128xf32>
    %c0_3 = arith.constant 0 : index
    %c0_4 = arith.constant 0 : index
    %10 = vector.load %arg3[%c0_3, %c0_4] : memref<2x128xf32, #tpu.memory_space<vmem>>, vector<2x128xf32>
    %cst_5 = arith.constant 0.000000e+00 : f32
    %11 = vector.broadcast %cst_5 : f32 to vector<384x128xf32>
    %c0_i32 = arith.constant 0 : i32
    %12 = vector.broadcast %c0_i32 : i32 to vector<384x1xi32>
    %13 = arith.cmpi eq, %2, %12 : vector<384x1xi32>
    %14 = vector.extract_strided_slice %10 {offsets = [0, 0], sizes = [1, 128], strides = [1, 1]} : vector<2x128xf32> to vector<1x128xf32>
    %15 = vector.shape_cast %13 : vector<384x1xi1> to vector<384x1xi1>
    %16 = vector.broadcast %15 : vector<384x1xi1> to vector<384x128xi1>
    %17 = vector.shape_cast %14 : vector<1x128xf32> to vector<1x128xf32>
    %18 = vector.broadcast %17 : vector<1x128xf32> to vector<384x128xf32>
    %19 = arith.select %16, %18, %11 : vector<384x128xi1>, vector<384x128xf32>
    %c1_i32 = arith.constant 1 : i32
    %20 = vector.broadcast %c1_i32 : i32 to vector<384x1xi32>
    %21 = arith.cmpi eq, %2, %20 : vector<384x1xi32>
    %22 = vector.extract_strided_slice %10 {offsets = [1, 0], sizes = [1, 128], strides = [1, 1]} : vector<2x128xf32> to vector<1x128xf32>
    %23 = vector.shape_cast %21 : vector<384x1xi1> to vector<384x1xi1>
    %24 = vector.broadcast %23 : vector<384x1xi1> to vector<384x128xi1>
    %25 = vector.shape_cast %22 : vector<1x128xf32> to vector<1x128xf32>
    %26 = vector.broadcast %25 : vector<1x128xf32> to vector<384x128xf32>
    %27 = arith.select %24, %26, %19 : vector<384x128xi1>, vector<384x128xf32>
    %28 = arith.addf %9, %27 : vector<384x128xf32>
    %c0_6 = arith.constant 0 : index
    %c0_7 = arith.constant 0 : index
    %29 = vector.load %arg4[%c0_6, %c0_7] : memref<384x128xf32, #tpu.memory_space<vmem>>, vector<384x128xf32>
    tpu.vector_store %arg4[%c0_6, %c0_7], %28 {strides = array<i32>} : memref<384x128xf32, #tpu.memory_space<vmem>>, vector<384x128xf32>,
    return
  }
  func.func @transform_0(%arg0: i32) -> (i32, i32) {
    %c0_i32 = arith.constant 0 : i32
    %c0_i32_0 = arith.constant 0 : i32
    return %arg0, %c0_i32 : i32, i32
  }
  func.func @transform_1(%arg0: i32) -> (i32, i32) {
    %c0_i32 = arith.constant 0 : i32
    %c0_i32_0 = arith.constant 0 : i32
    %c0_i32_1 = arith.constant 0 : i32
    return %c0_i32, %c0_i32_0 : i32, i32
  }
  func.func @transform_2(%arg0: i32) -> (i32, i32) {
    %c0_i32 = arith.constant 0 : i32
    %c0_i32_0 = arith.constant 0 : i32
    %c0_i32_1 = arith.constant 0 : i32
    return %c0_i32, %c0_i32_0 : i32, i32
  }
  func.func @transform_3(%arg0: i32) -> (i32, i32) {
    %c0_i32 = arith.constant 0 : i32
    %c0_i32_0 = arith.constant 0 : i32
    return %arg0, %c0_i32 : i32, i32
  }
}

</mosaic_0001>

<llo_original>
// kernel: tpu_custom_call.1
$region0: #{tpu_custom_call.1}
  #allocation0 [shape = 'u32[]', space=smem, size = 0x4, offset = 0x4, fixed_abs, tag = 'smem constant byte address 0x4 - core index']
  #allocation1 [shape = 'u32[72,128]{1,0:T(1,128)}', space=vmem, size = 0x9000, scoped, tag = 'internal scratch']
  %s0 = inlined_call_operand.vmem [shape: s32[768,2], index: 0, kind: input, shape index: {}]
  %s1 = inlined_call_operand.vmem [shape: f32[512,128], index: 1, kind: input, shape index: {}]
  %s2 = inlined_call_operand.vmem [shape: f32[2,128], index: 2, kind: input, shape index: {}]
  %s3 = inlined_call_operand.hbm [shape: f32[768,128], index: 3, kind: output, shape index: {}]
  %s4 = sld [smem:[#allocation0]]
  $region45: #{tpu_custom_call.1} parent=0
    _
  %s6 = ssub.s32 1, %s4
  %s7 = scalar_select 0, %s6, %s4
  $region1: #{tpu_custom_call.1} parent=0
    #allocation2 [shape = 'u8[393216]{0}', space=vmem, size = 0x60000, scoped, tag = 'output window, operand 0']
    #allocation3 [shape = 's32[2]{0}', space=sflag, size = 0x8, scoped, tag = 'scoped memory for tpu_custom_call.1']
    %8 = vsyncpa [#allocation3], 0
    %s9 = scalar_lea.sflag [#allocation3], 1
    %10 = vsyncpa %s9, 0
    loop: start=0, step=1, limit=4
    $region2: #{tpu_custom_call.1} parent=1 // loop_pre_header
      _
    $region3: #{tpu_custom_call.1} parent=1 // loop_header
      %s12 = sphi 0, %s16
      %p13 = scmp.ge.s32.totalorder %s12, 4
      %s22 = sphi 0, %s24
      %s25 = sphi 0, %s22
      %s26 = sphi 0, %s25
      %s42 = sphi 0, %s26
      %s46 = sphi 0, %s46
      %s48 = sphi 0, %s46
      %s49 = sphi 0, %s48
      %s63 = sphi 0, %s49
      %s67 = sphi 0, %s67
      %s69 = sphi 0, %s67
      %s70 = sphi 0, %s69
      %s84 = sphi 0, %s70
      %s90 = sphi 0, %s92
      %s93 = sphi 0, %s90
      %s94 = sphi 0, %s93
      %s110 = sphi 0, %s94
    $region4: #{tpu_custom_call.1} parent=1 // loop_header_branch
      %15 = sbr.rel (%p13) target = $region8
    $region5: #{tpu_custom_call.1} parent=1 // loop_body
      %s17 = ssub.s32 %s12, 1
      %s18 = ssub.s32 %s12, 2
      %s19 = sadd.s32 %s12, 1
      %s20 = ssub.s32 %s12, %s19
      %p21 = scmp.eq.s32.totalorder %s20, 0
      %s23 = sadd.s32 %s22, 1
      %s24 = scalar_select %p21, %s22, %s23
      %p27 = pneg %p21
      %p28 = scmp.eq.s32.totalorder %s12, 1
      %p29 = por %p27, %p28
      %p30 = scmp.ne.s32.totalorder %s22, %s25
      %p31 = scmp.eq.s32.totalorder %s12, 0
      %p32 = por %p30, %p31
      %p33 = scmp.ne.s32.totalorder %s22, %s25
      %p34 = scmp.eq.s32.totalorder %s17, 1
      %p35 = por %p33, %p34
      %p36 = scmp.ne.s32.totalorder %s25, %s26
      %p37 = scmp.eq.s32.totalorder %s17, 0
      %p38 = por %p36, %p37
      %p39 = scmp.ne.s32.totalorder %s25, %s26
      %p40 = scmp.eq.s32.totalorder %s18, 1
      %p41 = por %p39, %p40
      %p43 = scmp.ne.s32.totalorder %s26, %s42
      %p44 = scmp.eq.s32.totalorder %s18, 0
      %p45 = por %p43, %p44
      %s47 = sadd.s32 %s46, 1
      %p50 = scmp.eq.s32.totalorder %s12, 1
      %p51 = scmp.ne.s32.totalorder %s46, %s48
      %p52 = scmp.eq.s32.totalorder %s12, 0
      %p53 = por %p51, %p52
      %p54 = scmp.ne.s32.totalorder %s46, %s48
      %p55 = scmp.eq.s32.totalorder %s17, 1
      %p56 = por %p54, %p55
      %p57 = scmp.ne.s32.totalorder %s48, %s49
      %p58 = scmp.eq.s32.totalorder %s17, 0
      %p59 = por %p57, %p58
      %p60 = scmp.ne.s32.totalorder %s48, %s49
      %p61 = scmp.eq.s32.totalorder %s18, 1
      %p62 = por %p60, %p61
      %p64 = scmp.ne.s32.totalorder %s49, %s63
      %p65 = scmp.eq.s32.totalorder %s18, 0
      %p66 = por %p64, %p65
      %s68 = sadd.s32 %s67, 1
      %p71 = scmp.eq.s32.totalorder %s12, 1
      %p72 = scmp.ne.s32.totalorder %s67, %s69
      %p73 = scmp.eq.s32.totalorder %s12, 0
      %p74 = por %p72, %p73
      %p75 = scmp.ne.s32.totalorder %s67, %s69
      %p76 = scmp.eq.s32.totalorder %s17, 1
      %p77 = por %p75, %p76
      %p78 = scmp.ne.s32.totalorder %s69, %s70
      %p79 = scmp.eq.s32.totalorder %s17, 0
      %p80 = por %p78, %p79
      %p81 = scmp.ne.s32.totalorder %s69, %s70
      %p82 = scmp.eq.s32.totalorder %s18, 1
      %p83 = por %p81, %p82
      %p85 = scmp.ne.s32.totalorder %s70, %s84
      %p86 = scmp.eq.s32.totalorder %s18, 0
      %p87 = por %p85, %p86
      %s88 = ssub.s32 %s12, %s19
      %p89 = scmp.eq.s32.totalorder %s88, 0
      %s91 = sadd.s32 %s90, 1
      %s92 = scalar_select %p89, %s90, %s91
      %p95 = pneg %p89
      %p96 = scmp.eq.s32.totalorder %s12, 1
      %p97 = por %p95, %p96
      %p98 = scmp.ne.s32.totalorder %s90, %s93
      %p99 = scmp.eq.s32.totalorder %s12, 0
      %p100 = por %p98, %p99
      %p101 = scmp.ne.s32.totalorder %s90, %s93
      %p102 = scmp.eq.s32.totalorder %s17, 1
      %p103 = por %p101, %p102
      %p104 = scmp.ne.s32.totalorder %s93, %s94
      %p105 = scmp.eq.s32.totalorder %s17, 0
      %p106 = por %p104, %p105
      %p107 = scmp.ne.s32.totalorder %s93, %s94
      %p108 = scmp.eq.s32.totalorder %s18, 1
      %p109 = por %p107, %p108
      %p111 = scmp.ne.s32.totalorder %s94, %s110
      %p112 = scmp.eq.s32.totalorder %s18, 0
      %p113 = por %p111, %p112
      %p114 = scmp.le.s32.totalorder 1, %s12
      %p115 = scmp.lt.s32.totalorder %s12, 3
      %p116 = pnand %p114, %p115
      %p117 = pneg %p116
      // Predicated region
      $region9: #{tpu_custom_call.1} parent=5 // pred_check
        _
      $region10: #{tpu_custom_call.1} parent=5 // pred_check_branch
        %119 = sbr.rel (%p116) target = $region12
      $region11: #{tpu_custom_call.1} parent=5 // pred_region
        %s120 = ssub.s32 %s12, 1
        // Predicated region
        $region13: #{tpu_custom_call.1} parent=11 // pred_check
          %p121 = pneg %p59
        $region14: #{tpu_custom_call.1} parent=11 // pred_check_branch
          %123 = sbr.rel (%p121) target = $region16
        $region15: #{tpu_custom_call.1} parent=11 // pred_region
          _
        $region16: #{tpu_custom_call.1} parent=11 // pred_fallthru
          _
        // Predicated region
        $region17: #{tpu_custom_call.1} parent=11 // pred_check
          %p124 = pneg %p80
        $region18: #{tpu_custom_call.1} parent=11 // pred_check_branch
          %126 = sbr.rel (%p124) target = $region20
        $region19: #{tpu_custom_call.1} parent=11 // pred_region
          _
        $region20: #{tpu_custom_call.1} parent=11 // pred_fallthru
          _
      $region12: #{tpu_custom_call.1} parent=5 // pred_fallthru
        _
      %p127 = scmp.lt.s32.totalorder %s12, 2
      // Predicated region
      $region21: #{tpu_custom_call.1} parent=5 // pred_check
        %p128 = pneg %p127
      $region22: #{tpu_custom_call.1} parent=5 // pred_check_branch
        %130 = sbr.rel (%p128) target = $region24
      $region23: #{tpu_custom_call.1} parent=5 // pred_region
        // Predicated region
        $region25: #{tpu_custom_call.1} parent=23 // pred_check
          %p131 = pneg %p32
        $region26: #{tpu_custom_call.1} parent=23 // pred_check_branch
          %133 = sbr.rel (%p131) target = $region28
        $region27: #{tpu_custom_call.1} parent=23 // pred_region
          %s134 = smul.u32 48, %s12
          %p135 = scmp.lt.s32.totalorder %s134, 95
          %s136 = scalar_select %p135, %s134, 95
          %s137 = smul.addr %s136, 8
          %s138 = scalar_lea.vmem %s0, %s137
          %s139 = smul.u32 48, %s12
        $region28: #{tpu_custom_call.1} parent=23 // pred_fallthru
          _
      $region24: #{tpu_custom_call.1} parent=5 // pred_fallthru
        _
      %p140 = scmp.le.s32.totalorder 1, %s12
      %p141 = scmp.lt.s32.totalorder %s12, 3
      %p142 = pnand %p140, %p141
      %p143 = pneg %p142
      // Predicated region
      $region29: #{tpu_custom_call.1} parent=5 // pred_check
        _
      $region30: #{tpu_custom_call.1} parent=5 // pred_check_branch
        %145 = sbr.rel (%p142) target = $region32
      $region31: #{tpu_custom_call.1} parent=5 // pred_region
        %s146 = ssub.s32 %s12, 1
        %s147 = smul.u32 48, %s17
        %p148 = scmp.lt.s32.totalorder %s147, 95
        %s149 = scalar_select %p148, %s147, 95
        %s150 = smul.addr %s149, 8
        %s151 = scalar_lea.vmem %s0, %s150
        %p152 = pneg %p38
        %p153 = pneg %p35
        %p154 = pneg %p59
        %p155 = pneg %p56
        %p156 = pneg %p80
        %p157 = pneg %p77
        %p158 = pneg %p106
        %p159 = pneg %p103
        %s160 = sand.u32 %s93, 1
        %s161 = scalar_lea.sflag [#allocation3], %s160
        %s162 = sand.u32 %s93, 1
        %s163 = smul.addr %s162, 384
        %s164 = scalar_lea.vmem [#allocation2], %s163
        %s165 = smul.u32 48, %s17
        %p166 = scmp.lt.s32.totalorder %s165, 95
        %s167 = scalar_select %p166, %s165, 95
        %s168 = smul.addr %s167, 8
        %s169 = scalar_lea.vmem %s0, %s168
        %s170 = smul.u32 48, %s17
        %s171 = smul.u32 48, %s17
        %v172 = vld [vmem:[%s169] sm:$0xff]
        %v173 = vld [vmem:[%s169 + $0x8] sm:$0xff]
        %v174 = vld [vmem:[%s169 + $0x10] sm:$0xff]
        %v175 = vld [vmem:[%s169 + $0x18] sm:$0xff]
        %v176 = vld [vmem:[%s169 + $0x20] sm:$0xff]
        %v177 = vld [vmem:[%s169 + $0x28] sm:$0xff]
        %v178 = vld [vmem:[%s169 + $0x30] sm:$0xff]
        %v179 = vld [vmem:[%s169 + $0x38] sm:$0xff]
        %v180 = vld [vmem:[%s169 + $0x40] sm:$0xff]
        %v181 = vld [vmem:[%s169 + $0x48] sm:$0xff]
        %v182 = vld [vmem:[%s169 + $0x50] sm:$0xff]
        %v183 = vld [vmem:[%s169 + $0x58] sm:$0xff]
        %v184 = vld [vmem:[%s169 + $0x60] sm:$0xff]
        %v185 = vld [vmem:[%s169 + $0x68] sm:$0xff]
        %v186 = vld [vmem:[%s169 + $0x70] sm:$0xff]
        %v187 = vld [vmem:[%s169 + $0x78] sm:$0xff]
        %v188 = vld [vmem:[%s169 + $0x80] sm:$0xff]
        %v189 = vld [vmem:[%s169 + $0x88] sm:$0xff]
        %v190 = vld [vmem:[%s169 + $0x90] sm:$0xff]
        %v191 = vld [vmem:[%s169 + $0x98] sm:$0xff]
        %v192 = vld [vmem:[%s169 + $0xa0] sm:$0xff]
        %v193 = vld [vmem:[%s169 + $0xa8] sm:$0xff]
        %v194 = vld [vmem:[%s169 + $0xb0] sm:$0xff]
        %v195 = vld [vmem:[%s169 + $0xb8] sm:$0xff]
        %v196 = vld [vmem:[%s169 + $0xc0] sm:$0xff]
        %v197 = vld [vmem:[%s169 + $0xc8] sm:$0xff]
        %v198 = vld [vmem:[%s169 + $0xd0] sm:$0xff]
        %v199 = vld [vmem:[%s169 + $0xd8] sm:$0xff]
        %v200 = vld [vmem:[%s169 + $0xe0] sm:$0xff]
        %v201 = vld [vmem:[%s169 + $0xe8] sm:$0xff]
        %v202 = vld [vmem:[%s169 + $0xf0] sm:$0xff]
        %v203 = vld [vmem:[%s169 + $0xf8] sm:$0xff]
        %v204 = vld [vmem:[%s169 + $0x100] sm:$0xff]
        %v205 = vld [vmem:[%s169 + $0x108] sm:$0xff]
        %v206 = vld [vmem:[%s169 + $0x110] sm:$0xff]
        %v207 = vld [vmem:[%s169 + $0x118] sm:$0xff]
        %v208 = vld [vmem:[%s169 + $0x120] sm:$0xff]
        %v209 = vld [vmem:[%s169 + $0x128] sm:$0xff]
        %v210 = vld [vmem:[%s169 + $0x130] sm:$0xff]
        %v211 = vld [vmem:[%s169 + $0x138] sm:$0xff]
        %v212 = vld [vmem:[%s169 + $0x140] sm:$0xff]
        %v213 = vld [vmem:[%s169 + $0x148] sm:$0xff]
        %v214 = vld [vmem:[%s169 + $0x150] sm:$0xff]
        %v215 = vld [vmem:[%s169 + $0x158] sm:$0xff]
        %v216 = vld [vmem:[%s169 + $0x160] sm:$0xff]
        %v217 = vld [vmem:[%s169 + $0x168] sm:$0xff]
        %v218 = vld [vmem:[%s169 + $0x170] sm:$0xff]
        %v219 = vld [vmem:[%s169 + $0x178] sm:$0xff]
        %v220 = vlaneseq
        %v221 = vand.u32 %v220, 127
        %v222 = vadd.s32 %v221, 128
        %v223 = vadd.s32 %v221, 256
        %v224 = vadd.s32 %v221, 384
        %225 = vset.pattern.permute.xlu0 0
        %226 = vperm.xlu0 %225, %v172
        %v227 = vpop.permute.xlu0 %226
        %228 = vset.pattern.permute.xlu0 0
        %229 = vperm.xlu0 %228, %v173
        %v230 = vpop.permute.xlu0 %229
        %231 = vset.pattern.permute.xlu0 0
        %232 = vperm.xlu0 %231, %v174
        %v233 = vpop.permute.xlu0 %232
        %234 = vset.pattern.permute.xlu0 0
        %235 = vperm.xlu0 %234, %v175
        %v236 = vpop.permute.xlu0 %235
        %237 = vset.pattern.permute.xlu0 0
        %238 = vperm.xlu0 %237, %v176
        %v239 = vpop.permute.xlu0 %238
        %240 = vset.pattern.permute.xlu0 0
        %241 = vperm.xlu0 %240, %v177
        %v242 = vpop.permute.xlu0 %241
        %243 = vset.pattern.permute.xlu0 0
        %244 = vperm.xlu0 %243, %v178
        %v245 = vpop.permute.xlu0 %244
        %246 = vset.pattern.permute.xlu0 0
        %247 = vperm.xlu0 %246, %v179
        %v248 = vpop.permute.xlu0 %247
        %249 = vset.pattern.permute.xlu0 0
        %250 = vperm.xlu0 %249, %v180
        %v251 = vpop.permute.xlu0 %250
        %252 = vset.pattern.permute.xlu0 0
        %253 = vperm.xlu0 %252, %v181
        %v254 = vpop.permute.xlu0 %253
        %255 = vset.pattern.permute.xlu0 0
        %256 = vperm.xlu0 %255, %v182
        %v257 = vpop.permute.xlu0 %256
        %258 = vset.pattern.permute.xlu0 0
        %259 = vperm.xlu0 %258, %v183
        %v260 = vpop.permute.xlu0 %259
        %261 = vset.pattern.permute.xlu0 0
        %262 = vperm.xlu0 %261, %v184
        %v263 = vpop.permute.xlu0 %262
        %264 = vset.pattern.permute.xlu0 0
        %265 = vperm.xlu0 %264, %v185
        %v266 = vpop.permute.xlu0 %265
        %267 = vset.pattern.permute.xlu0 0
        %268 = vperm.xlu0 %267, %v186
        %v269 = vpop.permute.xlu0 %268
        %270 = vset.pattern.permute.xlu0 0
        %271 = vperm.xlu0 %270, %v187
        %v272 = vpop.permute.xlu0 %271
        %273 = vset.pattern.permute.xlu0 0
        %274 = vperm.xlu0 %273, %v188
        %v275 = vpop.permute.xlu0 %274
        %276 = vset.pattern.permute.xlu0 0
        %277 = vperm.xlu0 %276, %v189
        %v278 = vpop.permute.xlu0 %277
        %279 = vset.pattern.permute.xlu0 0
        %280 = vperm.xlu0 %279, %v190
        %v281 = vpop.permute.xlu0 %280
        %282 = vset.pattern.permute.xlu0 0
        %283 = vperm.xlu0 %282, %v191
        %v284 = vpop.permute.xlu0 %283
        %285 = vset.pattern.permute.xlu0 0
        %286 = vperm.xlu0 %285, %v192
        %v287 = vpop.permute.xlu0 %286
        %288 = vset.pattern.permute.xlu0 0
        %289 = vperm.xlu0 %288, %v193
        %v290 = vpop.permute.xlu0 %289
        %291 = vset.pattern.permute.xlu0 0
        %292 = vperm.xlu0 %291, %v194
        %v293 = vpop.permute.xlu0 %292
        %294 = vset.pattern.permute.xlu0 0
        %295 = vperm.xlu0 %294, %v195
        %v296 = vpop.permute.xlu0 %295
        %297 = vset.pattern.permute.xlu0 0
        %298 = vperm.xlu0 %297, %v196
        %v299 = vpop.permute.xlu0 %298
        %300 = vset.pattern.permute.xlu0 0
        %301 = vperm.xlu0 %300, %v197
        %v302 = vpop.permute.xlu0 %301
        %303 = vset.pattern.permute.xlu0 0
        %304 = vperm.xlu0 %303, %v198
        %v305 = vpop.permute.xlu0 %304
        %306 = vset.pattern.permute.xlu0 0
        %307 = vperm.xlu0 %306, %v199
        %v308 = vpop.permute.xlu0 %307
        %309 = vset.pattern.permute.xlu0 0
        %310 = vperm.xlu0 %309, %v200
        %v311 = vpop.permute.xlu0 %310
        %312 = vset.pattern.permute.xlu0 0
        %313 = vperm.xlu0 %312, %v201
        %v314 = vpop.permute.xlu0 %313
        %315 = vset.pattern.permute.xlu0 0
        %316 = vperm.xlu0 %315, %v202
        %v317 = vpop.permute.xlu0 %316
        %318 = vset.pattern.permute.xlu0 0
        %319 = vperm.xlu0 %318, %v203
        %v320 = vpop.permute.xlu0 %319
        %321 = vset.pattern.permute.xlu0 0
        %322 = vperm.xlu0 %321, %v204
        %v323 = vpop.permute.xlu0 %322
        %324 = vset.pattern.permute.xlu0 0
        %325 = vperm.xlu0 %324, %v205
        %v326 = vpop.permute.xlu0 %325
        %327 = vset.pattern.permute.xlu0 0
        %328 = vperm.xlu0 %327, %v206
        %v329 = vpop.permute.xlu0 %328
        %330 = vset.pattern.permute.xlu0 0
        %331 = vperm.xlu0 %330, %v207
        %v332 = vpop.permute.xlu0 %331
        %333 = vset.pattern.permute.xlu0 0
        %334 = vperm.xlu0 %333, %v208
        %v335 = vpop.permute.xlu0 %334
        %336 = vset.pattern.permute.xlu0 0
        %337 = vperm.xlu0 %336, %v209
        %v338 = vpop.permute.xlu0 %337
        %339 = vset.pattern.permute.xlu0 0
        %340 = vperm.xlu0 %339, %v210
        %v341 = vpop.permute.xlu0 %340
        %342 = vset.pattern.permute.xlu0 0
        %343 = vperm.xlu0 %342, %v211
        %v344 = vpop.permute.xlu0 %343
        %345 = vset.pattern.permute.xlu0 0
        %346 = vperm.xlu0 %345, %v212
        %v347 = vpop.permute.xlu0 %346
        %348 = vset.pattern.permute.xlu0 0
        %349 = vperm.xlu0 %348, %v213
        %v350 = vpop.permute.xlu0 %349
        %351 = vset.pattern.permute.xlu0 0
        %352 = vperm.xlu0 %351, %v214
        %v353 = vpop.permute.xlu0 %352
        %354 = vset.pattern.permute.xlu0 0
        %355 = vperm.xlu0 %354, %v215
        %v356 = vpop.permute.xlu0 %355
        %357 = vset.pattern.permute.xlu0 0
        %358 = vperm.xlu0 %357, %v216
        %v359 = vpop.permute.xlu0 %358
        %360 = vset.pattern.permute.xlu0 0
        %361 = vperm.xlu0 %360, %v217
        %v362 = vpop.permute.xlu0 %361
        %363 = vset.pattern.permute.xlu0 0
        %364 = vperm.xlu0 %363, %v218
        %v365 = vpop.permute.xlu0 %364
        %366 = vset.pattern.permute.xlu0 0
        %367 = vperm.xlu0 %366, %v219
        %v368 = vpop.permute.xlu0 %367
        %vm369 = vcmp.eq.s32.totalorder %v221, %v227
        %vm370 = vcmp.eq.s32.totalorder %v222, %v227
        %vm371 = vcmp.eq.s32.totalorder %v223, %v227
        %vm372 = vcmp.eq.s32.totalorder %v224, %v227
        %vm373 = vcmp.eq.s32.totalorder %v221, %v230
        %vm374 = vcmp.eq.s32.totalorder %v222, %v230
        %vm375 = vcmp.eq.s32.totalorder %v223, %v230
        %vm376 = vcmp.eq.s32.totalorder %v224, %v230
        %vm377 = vcmp.eq.s32.totalorder %v221, %v233
        %vm378 = vcmp.eq.s32.totalorder %v222, %v233
        %vm379 = vcmp.eq.s32.totalorder %v223, %v233
        %vm380 = vcmp.eq.s32.totalorder %v224, %v233
        %vm381 = vcmp.eq.s32.totalorder %v221, %v236
        %vm382 = vcmp.eq.s32.totalorder %v222, %v236
        %vm383 = vcmp.eq.s32.totalorder %v223, %v236
        %vm384 = vcmp.eq.s32.totalorder %v224, %v236
        %vm385 = vcmp.eq.s32.totalorder %v221, %v239
        %vm386 = vcmp.eq.s32.totalorder %v222, %v239
        %vm387 = vcmp.eq.s32.totalorder %v223, %v239
        %vm388 = vcmp.eq.s32.totalorder %v224, %v239
        %vm389 = vcmp.eq.s32.totalorder %v221, %v242
        %vm390 = vcmp.eq.s32.totalorder %v222, %v242
        %vm391 = vcmp.eq.s32.totalorder %v223, %v242
        %vm392 = vcmp.eq.s32.totalorder %v224, %v242
        %vm393 = vcmp.eq.s32.totalorder %v221, %v245
        %vm394 = vcmp.eq.s32.totalorder %v222, %v245
        %vm395 = vcmp.eq.s32.totalorder %v223, %v245
        %vm396 = vcmp.eq.s32.totalorder %v224, %v245
        %vm397 = vcmp.eq.s32.totalorder %v221, %v248
        %vm398 = vcmp.eq.s32.totalorder %v222, %v248
        %vm399 = vcmp.eq.s32.totalorder %v223, %v248
        %vm400 = vcmp.eq.s32.totalorder %v224, %v248
        %vm401 = vcmp.eq.s32.totalorder %v221, %v251
        %vm402 = vcmp.eq.s32.totalorder %v222, %v251
        %vm403 = vcmp.eq.s32.totalorder %v223, %v251
        %vm404 = vcmp.eq.s32.totalorder %v224, %v251
        %vm405 = vcmp.eq.s32.totalorder %v221, %v254
        %vm406 = vcmp.eq.s32.totalorder %v222, %v254
        %vm407 = vcmp.eq.s32.totalorder %v223, %v254
        %vm408 = vcmp.eq.s32.totalorder %v224, %v254
        %vm409 = vcmp.eq.s32.totalorder %v221, %v257
        %vm410 = vcmp.eq.s32.totalorder %v222, %v257
        %vm411 = vcmp.eq.s32.totalorder %v223, %v257
        %vm412 = vcmp.eq.s32.totalorder %v224, %v257
        %vm413 = vcmp.eq.s32.totalorder %v221, %v260
        %vm414 = vcmp.eq.s32.totalorder %v222, %v260
        %vm415 = vcmp.eq.s32.totalorder %v223, %v260
        %vm416 = vcmp.eq.s32.totalorder %v224, %v260
        %vm417 = vcmp.eq.s32.totalorder %v221, %v263
        %vm418 = vcmp.eq.s32.totalorder %v222, %v263
        %vm419 = vcmp.eq.s32.totalorder %v223, %v263
        %vm420 = vcmp.eq.s32.totalorder %v224, %v263
        %vm421 = vcmp.eq.s32.totalorder %v221, %v266
        %vm422 = vcmp.eq.s32.totalorder %v222, %v266
        %vm423 = vcmp.eq.s32.totalorder %v223, %v266
        %vm424 = vcmp.eq.s32.totalorder %v224, %v266
        %vm425 = vcmp.eq.s32.totalorder %v221, %v269
        %vm426 = vcmp.eq.s32.totalorder %v222, %v269
        %vm427 = vcmp.eq.s32.totalorder %v223, %v269
        %vm428 = vcmp.eq.s32.totalorder %v224, %v269
        %vm429 = vcmp.eq.s32.totalorder %v221, %v272
        %vm430 = vcmp.eq.s32.totalorder %v222, %v272
        %vm431 = vcmp.eq.s32.totalorder %v223, %v272
        %vm432 = vcmp.eq.s32.totalorder %v224, %v272
        %vm433 = vcmp.eq.s32.totalorder %v221, %v275
        %vm434 = vcmp.eq.s32.totalorder %v222, %v275
        %vm435 = vcmp.eq.s32.totalorder %v223, %v275
        %vm436 = vcmp.eq.s32.totalorder %v224, %v275
        %vm437 = vcmp.eq.s32.totalorder %v221, %v278
        %vm438 = vcmp.eq.s32.totalorder %v222, %v278
        %vm439 = vcmp.eq.s32.totalorder %v223, %v278
        %vm440 = vcmp.eq.s32.totalorder %v224, %v278
        %vm441 = vcmp.eq.s32.totalorder %v221, %v281
        %vm442 = vcmp.eq.s32.totalorder %v222, %v281
        %vm443 = vcmp.eq.s32.totalorder %v223, %v281
        %vm444 = vcmp.eq.s32.totalorder %v224, %v281
        %vm445 = vcmp.eq.s32.totalorder %v221, %v284
        %vm446 = vcmp.eq.s32.totalorder %v222, %v284
        %vm447 = vcmp.eq.s32.totalorder %v223, %v284
        %vm448 = vcmp.eq.s32.totalorder %v224, %v284
        %vm449 = vcmp.eq.s32.totalorder %v221, %v287
        %vm450 = vcmp.eq.s32.totalorder %v222, %v287
        %vm451 = vcmp.eq.s32.totalorder %v223, %v287
        %vm452 = vcmp.eq.s32.totalorder %v224, %v287
        %vm453 = vcmp.eq.s32.totalorder %v221, %v290
        %vm454 = vcmp.eq.s32.totalorder %v222, %v290
        %vm455 = vcmp.eq.s32.totalorder %v223, %v290
        %vm456 = vcmp.eq.s32.totalorder %v224, %v290
        %vm457 = vcmp.eq.s32.totalorder %v221, %v293
        %vm458 = vcmp.eq.s32.totalorder %v222, %v293
        %vm459 = vcmp.eq.s32.totalorder %v223, %v293
        %vm460 = vcmp.eq.s32.totalorder %v224, %v293
        %vm461 = vcmp.eq.s32.totalorder %v221, %v296
        %vm462 = vcmp.eq.s32.totalorder %v222, %v296
        %vm463 = vcmp.eq.s32.totalorder %v223, %v296
        %vm464 = vcmp.eq.s32.totalorder %v224, %v296
        %vm465 = vcmp.eq.s32.totalorder %v221, %v299
        %vm466 = vcmp.eq.s32.totalorder %v222, %v299
        %vm467 = vcmp.eq.s32.totalorder %v223, %v299
        %vm468 = vcmp.eq.s32.totalorder %v224, %v299
        %vm469 = vcmp.eq.s32.totalorder %v221, %v302
        %vm470 = vcmp.eq.s32.totalorder %v222, %v302
        %vm471 = vcmp.eq.s32.totalorder %v223, %v302
        %vm472 = vcmp.eq.s32.totalorder %v224, %v302
        %vm473 = vcmp.eq.s32.totalorder %v221, %v305
        %vm474 = vcmp.eq.s32.totalorder %v222, %v305
        %vm475 = vcmp.eq.s32.totalorder %v223, %v305
        %vm476 = vcmp.eq.s32.totalorder %v224, %v305
        %vm477 = vcmp.eq.s32.totalorder %v221, %v308
        %vm478 = vcmp.eq.s32.totalorder %v222, %v308
        %vm479 = vcmp.eq.s32.totalorder %v223, %v308
        %vm480 = vcmp.eq.s32.totalorder %v224, %v308
        %vm481 = vcmp.eq.s32.totalorder %v221, %v311
        %vm482 = vcmp.eq.s32.totalorder %v222, %v311
        %vm483 = vcmp.eq.s32.totalorder %v223, %v311
        %vm484 = vcmp.eq.s32.totalorder %v224, %v311
        %vm485 = vcmp.eq.s32.totalorder %v221, %v314
        %vm486 = vcmp.eq.s32.totalorder %v222, %v314
        %vm487 = vcmp.eq.s32.totalorder %v223, %v314
        %vm488 = vcmp.eq.s32.totalorder %v224, %v314
        %vm489 = vcmp.eq.s32.totalorder %v221, %v317
        %vm490 = vcmp.eq.s32.totalorder %v222, %v317
        %vm491 = vcmp.eq.s32.totalorder %v223, %v317
        %vm492 = vcmp.eq.s32.totalorder %v224, %v317
        %vm493 = vcmp.eq.s32.totalorder %v221, %v320
        %vm494 = vcmp.eq.s32.totalorder %v222, %v320
        %vm495 = vcmp.eq.s32.totalorder %v223, %v320
        %vm496 = vcmp.eq.s32.totalorder %v224, %v320
        %vm497 = vcmp.eq.s32.totalorder %v221, %v323
        %vm498 = vcmp.eq.s32.totalorder %v222, %v323
        %vm499 = vcmp.eq.s32.totalorder %v223, %v323
        %vm500 = vcmp.eq.s32.totalorder %v224, %v323
        %vm501 = vcmp.eq.s32.totalorder %v221, %v326
        %vm502 = vcmp.eq.s32.totalorder %v222, %v326
        %vm503 = vcmp.eq.s32.totalorder %v223, %v326
        %vm504 = vcmp.eq.s32.totalorder %v224, %v326
        %vm505 = vcmp.eq.s32.totalorder %v221, %v329
        %vm506 = vcmp.eq.s32.totalorder %v222, %v329
        %vm507 = vcmp.eq.s32.totalorder %v223, %v329
        %vm508 = vcmp.eq.s32.totalorder %v224, %v329
        %vm509 = vcmp.eq.s32.totalorder %v221, %v332
        %vm510 = vcmp.eq.s32.totalorder %v222, %v332
        %vm511 = vcmp.eq.s32.totalorder %v223, %v332
        %vm512 = vcmp.eq.s32.totalorder %v224, %v332
        %vm513 = vcmp.eq.s32.totalorder %v221, %v335
        %vm514 = vcmp.eq.s32.totalorder %v222, %v335
        %vm515 = vcmp.eq.s32.totalorder %v223, %v335
        %vm516 = vcmp.eq.s32.totalorder %v224, %v335
        %vm517 = vcmp.eq.s32.totalorder %v221, %v338
        %vm518 = vcmp.eq.s32.totalorder %v222, %v338
        %vm519 = vcmp.eq.s32.totalorder %v223, %v338
        %vm520 = vcmp.eq.s32.totalorder %v224, %v338
        %vm521 = vcmp.eq.s32.totalorder %v221, %v341
        %vm522 = vcmp.eq.s32.totalorder %v222, %v341
        %vm523 = vcmp.eq.s32.totalorder %v223, %v341
        %vm524 = vcmp.eq.s32.totalorder %v224, %v341
        %vm525 = vcmp.eq.s32.totalorder %v221, %v344
        %vm526 = vcmp.eq.s32.totalorder %v222, %v344
        %vm527 = vcmp.eq.s32.totalorder %v223, %v344
        %vm528 = vcmp.eq.s32.totalorder %v224, %v344
        %vm529 = vcmp.eq.s32.totalorder %v221, %v347
        %vm530 = vcmp.eq.s32.totalorder %v222, %v347
        %vm531 = vcmp.eq.s32.totalorder %v223, %v347
        %vm532 = vcmp.eq.s32.totalorder %v224, %v347
        %vm533 = vcmp.eq.s32.totalorder %v221, %v350
        %vm534 = vcmp.eq.s32.totalorder %v222, %v350
        %vm535 = vcmp.eq.s32.totalorder %v223, %v350
        %vm536 = vcmp.eq.s32.totalorder %v224, %v350
        %vm537 = vcmp.eq.s32.totalorder %v221, %v353
        %vm538 = vcmp.eq.s32.totalorder %v222, %v353
        %vm539 = vcmp.eq.s32.totalorder %v223, %v353
        %vm540 = vcmp.eq.s32.totalorder %v224, %v353
        %vm541 = vcmp.eq.s32.totalorder %v221, %v356
        %vm542 = vcmp.eq.s32.totalorder %v222, %v356
        %vm543 = vcmp.eq.s32.totalorder %v223, %v356
        %vm544 = vcmp.eq.s32.totalorder %v224, %v356
        %vm545 = vcmp.eq.s32.totalorder %v221, %v359
        %vm546 = vcmp.eq.s32.totalorder %v222, %v359
        %vm547 = vcmp.eq.s32.totalorder %v223, %v359
        %vm548 = vcmp.eq.s32.totalorder %v224, %v359
        %vm549 = vcmp.eq.s32.totalorder %v221, %v362
        %vm550 = vcmp.eq.s32.totalorder %v222, %v362
        %vm551 = vcmp.eq.s32.totalorder %v223, %v362
        %vm552 = vcmp.eq.s32.totalorder %v224, %v362
        %vm553 = vcmp.eq.s32.totalorder %v221, %v365
        %vm554 = vcmp.eq.s32.totalorder %v222, %v365
        %vm555 = vcmp.eq.s32.totalorder %v223, %v365
        %vm556 = vcmp.eq.s32.totalorder %v224, %v365
        %vm557 = vcmp.eq.s32.totalorder %v221, %v368
        %vm558 = vcmp.eq.s32.totalorder %v222, %v368
        %vm559 = vcmp.eq.s32.totalorder %v223, %v368
        %vm560 = vcmp.eq.s32.totalorder %v224, %v368
        %v561 = vsel %vm369, 1, 0
        %v562 = vsel %vm370, 1, 0
        %v563 = vsel %vm371, 1, 0
        %v564 = vsel %vm372, 1, 0
        %v565 = vsel %vm373, 1, 0
        %v566 = vsel %vm374, 1, 0
        %v567 = vsel %vm375, 1, 0
        %v568 = vsel %vm376, 1, 0
        %v569 = vsel %vm377, 1, 0
        %v570 = vsel %vm378, 1, 0
        %v571 = vsel %vm379, 1, 0
        %v572 = vsel %vm380, 1, 0
        %v573 = vsel %vm381, 1, 0
        %v574 = vsel %vm382, 1, 0
        %v575 = vsel %vm383, 1, 0
        %v576 = vsel %vm384, 1, 0
        %v577 = vsel %vm385, 1, 0
        %v578 = vsel %vm386, 1, 0
        %v579 = vsel %vm387, 1, 0
        %v580 = vsel %vm388, 1, 0
        %v581 = vsel %vm389, 1, 0
        %v582 = vsel %vm390, 1, 0
        %v583 = vsel %vm391, 1, 0
        %v584 = vsel %vm392, 1, 0
        %v585 = vsel %vm393, 1, 0
        %v586 = vsel %vm394, 1, 0
        %v587 = vsel %vm395, 1, 0
        %v588 = vsel %vm396, 1, 0
        %v589 = vsel %vm397, 1, 0
        %v590 = vsel %vm398, 1, 0
        %v591 = vsel %vm399, 1, 0
        %v592 = vsel %vm400, 1, 0
        %v593 = vsel %vm401, 1, 0
        %v594 = vsel %vm402, 1, 0
        %v595 = vsel %vm403, 1, 0
        %v596 = vsel %vm404, 1, 0
        %v597 = vsel %vm405, 1, 0
        %v598 = vsel %vm406, 1, 0
        %v599 = vsel %vm407, 1, 0
        %v600 = vsel %vm408, 1, 0
        %v601 = vsel %vm409, 1, 0
        %v602 = vsel %vm410, 1, 0
        %v603 = vsel %vm411, 1, 0
        %v604 = vsel %vm412, 1, 0
        %v605 = vsel %vm413, 1, 0
        %v606 = vsel %vm414, 1, 0
        %v607 = vsel %vm415, 1, 0
        %v608 = vsel %vm416, 1, 0
        %v609 = vsel %vm417, 1, 0
        %v610 = vsel %vm418, 1, 0
        %v611 = vsel %vm419, 1, 0
        %v612 = vsel %vm420, 1, 0
        %v613 = vsel %vm421, 1, 0
        %v614 = vsel %vm422, 1, 0
        %v615 = vsel %vm423, 1, 0
        %v616 = vsel %vm424, 1, 0
        %v617 = vsel %vm425, 1, 0
        %v618 = vsel %vm426, 1, 0
        %v619 = vsel %vm427, 1, 0
        %v620 = vsel %vm428, 1, 0
        %v621 = vsel %vm429, 1, 0
        %v622 = vsel %vm430, 1, 0
        %v623 = vsel %vm431, 1, 0
        %v624 = vsel %vm432, 1, 0
        %v625 = vsel %vm433, 1, 0
        %v626 = vsel %vm434, 1, 0
        %v627 = vsel %vm435, 1, 0
        %v628 = vsel %vm436, 1, 0
        %v629 = vsel %vm437, 1, 0
        %v630 = vsel %vm438, 1, 0
        %v631 = vsel %vm439, 1, 0
        %v632 = vsel %vm440, 1, 0
        %v633 = vsel %vm441, 1, 0
        %v634 = vsel %vm442, 1, 0
        %v635 = vsel %vm443, 1, 0
        %v636 = vsel %vm444, 1, 0
        %v637 = vsel %vm445, 1, 0
        %v638 = vsel %vm446, 1, 0
        %v639 = vsel %vm447, 1, 0
        %v640 = vsel %vm448, 1, 0
        %v641 = vsel %vm449, 1, 0
        %v642 = vsel %vm450, 1, 0
        %v643 = vsel %vm451, 1, 0
        %v644 = vsel %vm452, 1, 0
        %v645 = vsel %vm453, 1, 0
        %v646 = vsel %vm454, 1, 0
        %v647 = vsel %vm455, 1, 0
        %v648 = vsel %vm456, 1, 0
        %v649 = vsel %vm457, 1, 0
        %v650 = vsel %vm458, 1, 0
        %v651 = vsel %vm459, 1, 0
        %v652 = vsel %vm460, 1, 0
        %v653 = vsel %vm461, 1, 0
        %v654 = vsel %vm462, 1, 0
        %v655 = vsel %vm463, 1, 0
        %v656 = vsel %vm464, 1, 0
        %v657 = vsel %vm465, 1, 0
        %v658 = vsel %vm466, 1, 0
        %v659 = vsel %vm467, 1, 0
        %v660 = vsel %vm468, 1, 0
        %v661 = vsel %vm469, 1, 0
        %v662 = vsel %vm470, 1, 0
        %v663 = vsel %vm471, 1, 0
        %v664 = vsel %vm472, 1, 0
        %v665 = vsel %vm473, 1, 0
        %v666 = vsel %vm474, 1, 0
        %v667 = vsel %vm475, 1, 0
        %v668 = vsel %vm476, 1, 0
        %v669 = vsel %vm477, 1, 0
        %v670 = vsel %vm478, 1, 0
        %v671 = vsel %vm479, 1, 0
        %v672 = vsel %vm480, 1, 0
        %v673 = vsel %vm481, 1, 0
        %v674 = vsel %vm482, 1, 0
        %v675 = vsel %vm483, 1, 0
        %v676 = vsel %vm484, 1, 0
        %v677 = vsel %vm485, 1, 0
        %v678 = vsel %vm486, 1, 0
        %v679 = vsel %vm487, 1, 0
        %v680 = vsel %vm488, 1, 0
        %v681 = vsel %vm489, 1, 0
        %v682 = vsel %vm490, 1, 0
        %v683 = vsel %vm491, 1, 0
        %v684 = vsel %vm492, 1, 0
        %v685 = vsel %vm493, 1, 0
        %v686 = vsel %vm494, 1, 0
        %v687 = vsel %vm495, 1, 0
        %v688 = vsel %vm496, 1, 0
        %v689 = vsel %vm497, 1, 0
        %v690 = vsel %vm498, 1, 0
        %v691 = vsel %vm499, 1, 0
        %v692 = vsel %vm500, 1, 0
        %v693 = vsel %vm501, 1, 0
        %v694 = vsel %vm502, 1, 0
        %v695 = vsel %vm503, 1, 0
        %v696 = vsel %vm504, 1, 0
        %v697 = vsel %vm505, 1, 0
        %v698 = vsel %vm506, 1, 0
        %v699 = vsel %vm507, 1, 0
        %v700 = vsel %vm508, 1, 0
        %v701 = vsel %vm509, 1, 0
        %v702 = vsel %vm510, 1, 0
        %v703 = vsel %vm511, 1, 0
        %v704 = vsel %vm512, 1, 0
        %v705 = vsel %vm513, 1, 0
        %v706 = vsel %vm514, 1, 0
        %v707 = vsel %vm515, 1, 0
        %v708 = vsel %vm516, 1, 0
        %v709 = vsel %vm517, 1, 0
        %v710 = vsel %vm518, 1, 0
        %v711 = vsel %vm519, 1, 0
        %v712 = vsel %vm520, 1, 0
        %v713 = vsel %vm521, 1, 0
        %v714 = vsel %vm522, 1, 0
        %v715 = vsel %vm523, 1, 0
        %v716 = vsel %vm524, 1, 0
        %v717 = vsel %vm525, 1, 0
        %v718 = vsel %vm526, 1, 0
        %v719 = vsel %vm527, 1, 0
        %v720 = vsel %vm528, 1, 0
        %v721 = vsel %vm529, 1, 0
        %v722 = vsel %vm530, 1, 0
        %v723 = vsel %vm531, 1, 0
        %v724 = vsel %vm532, 1, 0
        %v725 = vsel %vm533, 1, 0
        %v726 = vsel %vm534, 1, 0
        %v727 = vsel %vm535, 1, 0
        %v728 = vsel %vm536, 1, 0
        %v729 = vsel %vm537, 1, 0
        %v730 = vsel %vm538, 1, 0
        %v731 = vsel %vm539, 1, 0
        %v732 = vsel %vm540, 1, 0
        %v733 = vsel %vm541, 1, 0
        %v734 = vsel %vm542, 1, 0
        %v735 = vsel %vm543, 1, 0
        %v736 = vsel %vm544, 1, 0
        %v737 = vsel %vm545, 1, 0
        %v738 = vsel %vm546, 1, 0
        %v739 = vsel %vm547, 1, 0
        %v740 = vsel %vm548, 1, 0
        %v741 = vsel %vm549, 1, 0
        %v742 = vsel %vm550, 1, 0
        %v743 = vsel %vm551, 1, 0
        %v744 = vsel %vm552, 1, 0
        %v745 = vsel %vm553, 1, 0
        %v746 = vsel %vm554, 1, 0
        %v747 = vsel %vm555, 1, 0
        %v748 = vsel %vm556, 1, 0
        %v749 = vsel %vm557, 1, 0
        %v750 = vsel %vm558, 1, 0
        %v751 = vsel %vm559, 1, 0
        %v752 = vsel %vm560, 1, 0
        %v753 = vcvt.s32.f32 %v561
        %v754 = vcvt.s32.f32 %v562
        %v755 = vcvt.s32.f32 %v563
        %v756 = vcvt.s32.f32 %v564
        %v757 = vcvt.s32.f32 %v565
        %v758 = vcvt.s32.f32 %v566
        %v759 = vcvt.s32.f32 %v567
        %v760 = vcvt.s32.f32 %v568
        %v761 = vcvt.s32.f32 %v569
        %v762 = vcvt.s32.f32 %v570
        %v763 = vcvt.s32.f32 %v571
        %v764 = vcvt.s32.f32 %v572
        %v765 = vcvt.s32.f32 %v573
        %v766 = vcvt.s32.f32 %v574
        %v767 = vcvt.s32.f32 %v575
        %v768 = vcvt.s32.f32 %v576
        %v769 = vcvt.s32.f32 %v577
        %v770 = vcvt.s32.f32 %v578
        %v771 = vcvt.s32.f32 %v579
        %v772 = vcvt.s32.f32 %v580
        %v773 = vcvt.s32.f32 %v581
        %v774 = vcvt.s32.f32 %v582
        %v775 = vcvt.s32.f32 %v583
        %v776 = vcvt.s32.f32 %v584
        %v777 = vcvt.s32.f32 %v585
        %v778 = vcvt.s32.f32 %v586
        %v779 = vcvt.s32.f32 %v587
        %v780 = vcvt.s32.f32 %v588
        %v781 = vcvt.s32.f32 %v589
        %v782 = vcvt.s32.f32 %v590
        %v783 = vcvt.s32.f32 %v591
        %v784 = vcvt.s32.f32 %v592
        %v785 = vcvt.s32.f32 %v593
        %v786 = vcvt.s32.f32 %v594
        %v787 = vcvt.s32.f32 %v595
        %v788 = vcvt.s32.f32 %v596
        %v789 = vcvt.s32.f32 %v597
        %v790 = vcvt.s32.f32 %v598
        %v791 = vcvt.s32.f32 %v599
        %v792 = vcvt.s32.f32 %v600
        %v793 = vcvt.s32.f32 %v601
        %v794 = vcvt.s32.f32 %v602
        %v795 = vcvt.s32.f32 %v603
        %v796 = vcvt.s32.f32 %v604
        %v797 = vcvt.s32.f32 %v605
        %v798 = vcvt.s32.f32 %v606
        %v799 = vcvt.s32.f32 %v607
        %v800 = vcvt.s32.f32 %v608
        %v801 = vcvt.s32.f32 %v609
        %v802 = vcvt.s32.f32 %v610
        %v803 = vcvt.s32.f32 %v611
        %v804 = vcvt.s32.f32 %v612
        %v805 = vcvt.s32.f32 %v613
        %v806 = vcvt.s32.f32 %v614
        %v807 = vcvt.s32.f32 %v615
        %v808 = vcvt.s32.f32 %v616
        %v809 = vcvt.s32.f32 %v617
        %v810 = vcvt.s32.f32 %v618
        %v811 = vcvt.s32.f32 %v619
        %v812 = vcvt.s32.f32 %v620
        %v813 = vcvt.s32.f32 %v621
        %v814 = vcvt.s32.f32 %v622
        %v815 = vcvt.s32.f32 %v623
        %v816 = vcvt.s32.f32 %v624
        %v817 = vcvt.s32.f32 %v625
        %v818 = vcvt.s32.f32 %v626
        %v819 = vcvt.s32.f32 %v627
        %v820 = vcvt.s32.f32 %v628
        %v821 = vcvt.s32.f32 %v629
        %v822 = vcvt.s32.f32 %v630
        %v823 = vcvt.s32.f32 %v631
        %v824 = vcvt.s32.f32 %v632
        %v825 = vcvt.s32.f32 %v633
        %v826 = vcvt.s32.f32 %v634
        %v827 = vcvt.s32.f32 %v635
        %v828 = vcvt.s32.f32 %v636
        %v829 = vcvt.s32.f32 %v637
        %v830 = vcvt.s32.f32 %v638
        %v831 = vcvt.s32.f32 %v639
        %v832 = vcvt.s32.f32 %v640
        %v833 = vcvt.s32.f32 %v641
        %v834 = vcvt.s32.f32 %v642
        %v835 = vcvt.s32.f32 %v643
        %v836 = vcvt.s32.f32 %v644
        %v837 = vcvt.s32.f32 %v645
        %v838 = vcvt.s32.f32 %v646
        %v839 = vcvt.s32.f32 %v647
        %v840 = vcvt.s32.f32 %v648
        %v841 = vcvt.s32.f32 %v649
        %v842 = vcvt.s32.f32 %v650
        %v843 = vcvt.s32.f32 %v651
        %v844 = vcvt.s32.f32 %v652
        %v845 = vcvt.s32.f32 %v653
        %v846 = vcvt.s32.f32 %v654
        %v847 = vcvt.s32.f32 %v655
        %v848 = vcvt.s32.f32 %v656
        %v849 = vcvt.s32.f32 %v657
        %v850 = vcvt.s32.f32 %v658
        %v851 = vcvt.s32.f32 %v659
        %v852 = vcvt.s32.f32 %v660
        %v853 = vcvt.s32.f32 %v661
        %v854 = vcvt.s32.f32 %v662
        %v855 = vcvt.s32.f32 %v663
        %v856 = vcvt.s32.f32 %v664
        %v857 = vcvt.s32.f32 %v665
        %v858 = vcvt.s32.f32 %v666
        %v859 = vcvt.s32.f32 %v667
        %v860 = vcvt.s32.f32 %v668
        %v861 = vcvt.s32.f32 %v669
        %v862 = vcvt.s32.f32 %v670
        %v863 = vcvt.s32.f32 %v671
        %v864 = vcvt.s32.f32 %v672
        %v865 = vcvt.s32.f32 %v673
        %v866 = vcvt.s32.f32 %v674
        %v867 = vcvt.s32.f32 %v675
        %v868 = vcvt.s32.f32 %v676
        %v869 = vcvt.s32.f32 %v677
        %v870 = vcvt.s32.f32 %v678
        %v871 = vcvt.s32.f32 %v679
        %v872 = vcvt.s32.f32 %v680
        %v873 = vcvt.s32.f32 %v681
        %v874 = vcvt.s32.f32 %v682
        %v875 = vcvt.s32.f32 %v683
        %v876 = vcvt.s32.f32 %v684
        %v877 = vcvt.s32.f32 %v685
        %v878 = vcvt.s32.f32 %v686
        %v879 = vcvt.s32.f32 %v687
        %v880 = vcvt.s32.f32 %v688
        %v881 = vcvt.s32.f32 %v689
        %v882 = vcvt.s32.f32 %v690
        %v883 = vcvt.s32.f32 %v691
        %v884 = vcvt.s32.f32 %v692
        %v885 = vcvt.s32.f32 %v693
        %v886 = vcvt.s32.f32 %v694
        %v887 = vcvt.s32.f32 %v695
        %v888 = vcvt.s32.f32 %v696
        %v889 = vcvt.s32.f32 %v697
        %v890 = vcvt.s32.f32 %v698
        %v891 = vcvt.s32.f32 %v699
        %v892 = vcvt.s32.f32 %v700
        %v893 = vcvt.s32.f32 %v701
        %v894 = vcvt.s32.f32 %v702
        %v895 = vcvt.s32.f32 %v703
        %v896 = vcvt.s32.f32 %v704
        %v897 = vcvt.s32.f32 %v705
        %v898 = vcvt.s32.f32 %v706
        %v899 = vcvt.s32.f32 %v707
        %v900 = vcvt.s32.f32 %v708
        %v901 = vcvt.s32.f32 %v709
        %v902 = vcvt.s32.f32 %v710
        %v903 = vcvt.s32.f32 %v711
        %v904 = vcvt.s32.f32 %v712
        %v905 = vcvt.s32.f32 %v713
        %v906 = vcvt.s32.f32 %v714
        %v907 = vcvt.s32.f32 %v715
        %v908 = vcvt.s32.f32 %v716
        %v909 = vcvt.s32.f32 %v717
        %v910 = vcvt.s32.f32 %v718
        %v911 = vcvt.s32.f32 %v719
        %v912 = vcvt.s32.f32 %v720
        %v913 = vcvt.s32.f32 %v721
        %v914 = vcvt.s32.f32 %v722
        %v915 = vcvt.s32.f32 %v723
        %v916 = vcvt.s32.f32 %v724
        %v917 = vcvt.s32.f32 %v725
        %v918 = vcvt.s32.f32 %v726
        %v919 = vcvt.s32.f32 %v727
        %v920 = vcvt.s32.f32 %v728
        %v921 = vcvt.s32.f32 %v729
        %v922 = vcvt.s32.f32 %v730
        %v923 = vcvt.s32.f32 %v731
        %v924 = vcvt.s32.f32 %v732
        %v925 = vcvt.s32.f32 %v733
        %v926 = vcvt.s32.f32 %v734
        %v927 = vcvt.s32.f32 %v735
        %v928 = vcvt.s32.f32 %v736
        %v929 = vcvt.s32.f32 %v737
        %v930 = vcvt.s32.f32 %v738
        %v931 = vcvt.s32.f32 %v739
        %v932 = vcvt.s32.f32 %v740
        %v933 = vcvt.s32.f32 %v741
        %v934 = vcvt.s32.f32 %v742
        %v935 = vcvt.s32.f32 %v743
        %v936 = vcvt.s32.f32 %v744
        %v937 = vcvt.s32.f32 %v745
        %v938 = vcvt.s32.f32 %v746
        %v939 = vcvt.s32.f32 %v747
        %v940 = vcvt.s32.f32 %v748
        %v941 = vcvt.s32.f32 %v749
        %v942 = vcvt.s32.f32 %v750
        %v943 = vcvt.s32.f32 %v751
        %v944 = vcvt.s32.f32 %v752
        %v945 = vld [vmem:[%s1] sm:$0xff]
        %v946 = vld [vmem:[%s1 + $0x8] sm:$0xff]
        %v947 = vld [vmem:[%s1 + $0x10] sm:$0xff]
        %v948 = vld [vmem:[%s1 + $0x18] sm:$0xff]
        %v949 = vld [vmem:[%s1 + $0x20] sm:$0xff]
        %v950 = vld [vmem:[%s1 + $0x28] sm:$0xff]
        %v951 = vld [vmem:[%s1 + $0x30] sm:$0xff]
        %v952 = vld [vmem:[%s1 + $0x38] sm:$0xff]
        %v953 = vld [vmem:[%s1 + $0x40] sm:$0xff]
        %v954 = vld [vmem:[%s1 + $0x48] sm:$0xff]
        %v955 = vld [vmem:[%s1 + $0x50] sm:$0xff]
        %v956 = vld [vmem:[%s1 + $0x58] sm:$0xff]
        %v957 = vld [vmem:[%s1 + $0x60] sm:$0xff]
        %v958 = vld [vmem:[%s1 + $0x68] sm:$0xff]
        %v959 = vld [vmem:[%s1 + $0x70] sm:$0xff]
        %v960 = vld [vmem:[%s1 + $0x78] sm:$0xff]
        %v961 = vld [vmem:[%s1 + $0x80] sm:$0xff]
        %v962 = vld [vmem:[%s1 + $0x88] sm:$0xff]
        %v963 = vld [vmem:[%s1 + $0x90] sm:$0xff]
        %v964 = vld [vmem:[%s1 + $0x98] sm:$0xff]
        %v965 = vld [vmem:[%s1 + $0xa0] sm:$0xff]
        %v966 = vld [vmem:[%s1 + $0xa8] sm:$0xff]
        %v967 = vld [vmem:[%s1 + $0xb0] sm:$0xff]
        %v968 = vld [vmem:[%s1 + $0xb8] sm:$0xff]
        %v969 = vld [vmem:[%s1 + $0xc0] sm:$0xff]
        %v970 = vld [vmem:[%s1 + $0xc8] sm:$0xff]
        %v971 = vld [vmem:[%s1 + $0xd0] sm:$0xff]
        %v972 = vld [vmem:[%s1 + $0xd8] sm:$0xff]
        %v973 = vld [vmem:[%s1 + $0xe0] sm:$0xff]
        %v974 = vld [vmem:[%s1 + $0xe8] sm:$0xff]
        %v975 = vld [vmem:[%s1 + $0xf0] sm:$0xff]
        %v976 = vld [vmem:[%s1 + $0xf8] sm:$0xff]
        %v977 = vld [vmem:[%s1 + $0x100] sm:$0xff]
        %v978 = vld [vmem:[%s1 + $0x108] sm:$0xff]
        %v979 = vld [vmem:[%s1 + $0x110] sm:$0xff]
        %v980 = vld [vmem:[%s1 + $0x118] sm:$0xff]
        %v981 = vld [vmem:[%s1 + $0x120] sm:$0xff]
        %v982 = vld [vmem:[%s1 + $0x128] sm:$0xff]
        %v983 = vld [vmem:[%s1 + $0x130] sm:$0xff]
        %v984 = vld [vmem:[%s1 + $0x138] sm:$0xff]
        %v985 = vld [vmem:[%s1 + $0x140] sm:$0xff]
        %v986 = vld [vmem:[%s1 + $0x148] sm:$0xff]
        %v987 = vld [vmem:[%s1 + $0x150] sm:$0xff]
        %v988 = vld [vmem:[%s1 + $0x158] sm:$0xff]
        %v989 = vld [vmem:[%s1 + $0x160] sm:$0xff]
        %v990 = vld [vmem:[%s1 + $0x168] sm:$0xff]
        %v991 = vld [vmem:[%s1 + $0x170] sm:$0xff]
        %v992 = vld [vmem:[%s1 + $0x178] sm:$0xff]
        %v993 = vld [vmem:[%s1 + $0x180] sm:$0xff]
        %v994 = vld [vmem:[%s1 + $0x188] sm:$0xff]
        %v995 = vld [vmem:[%s1 + $0x190] sm:$0xff]
        %v996 = vld [vmem:[%s1 + $0x198] sm:$0xff]
        %v997 = vld [vmem:[%s1 + $0x1a0] sm:$0xff]
        %v998 = vld [vmem:[%s1 + $0x1a8] sm:$0xff]
        %v999 = vld [vmem:[%s1 + $0x1b0] sm:$0xff]
        %v1000 = vld [vmem:[%s1 + $0x1b8] sm:$0xff]
        %v1001 = vld [vmem:[%s1 + $0x1c0] sm:$0xff]
        %v1002 = vld [vmem:[%s1 + $0x1c8] sm:$0xff]
        %v1003 = vld [vmem:[%s1 + $0x1d0] sm:$0xff]
        %v1004 = vld [vmem:[%s1 + $0x1d8] sm:$0xff]
        %v1005 = vld [vmem:[%s1 + $0x1e0] sm:$0xff]
        %v1006 = vld [vmem:[%s1 + $0x1e8] sm:$0xff]
        %v1007 = vld [vmem:[%s1 + $0x1f0] sm:$0xff]
        %v1008 = vld [vmem:[%s1 + $0x1f8] sm:$0xff]
        %v1009 = vld [vmem:[%s2] sm:$0x3]
        %vm1010 = vcmp.eq.s32.totalorder %v172, 0
        %vm1011 = vcmp.eq.s32.totalorder %v173, 0
        %vm1012 = vcmp.eq.s32.totalorder %v174, 0
        %vm1013 = vcmp.eq.s32.totalorder %v175, 0
        %vm1014 = vcmp.eq.s32.totalorder %v176, 0
        %vm1015 = vcmp.eq.s32.totalorder %v177, 0
        %vm1016 = vcmp.eq.s32.totalorder %v178, 0
        %vm1017 = vcmp.eq.s32.totalorder %v179, 0
        %vm1018 = vcmp.eq.s32.totalorder %v180, 0
        %vm1019 = vcmp.eq.s32.totalorder %v181, 0
        %vm1020 = vcmp.eq.s32.totalorder %v182, 0
        %vm1021 = vcmp.eq.s32.totalorder %v183, 0
        %vm1022 = vcmp.eq.s32.totalorder %v184, 0
        %vm1023 = vcmp.eq.s32.totalorder %v185, 0
        %vm1024 = vcmp.eq.s32.totalorder %v186, 0
        %vm1025 = vcmp.eq.s32.totalorder %v187, 0
        %vm1026 = vcmp.eq.s32.totalorder %v188, 0
        %vm1027 = vcmp.eq.s32.totalorder %v189, 0
        %vm1028 = vcmp.eq.s32.totalorder %v190, 0
        %vm1029 = vcmp.eq.s32.totalorder %v191, 0
        %vm1030 = vcmp.eq.s32.totalorder %v192, 0
        %vm1031 = vcmp.eq.s32.totalorder %v193, 0
        %vm1032 = vcmp.eq.s32.totalorder %v194, 0
        %vm1033 = vcmp.eq.s32.totalorder %v195, 0
        %vm1034 = vcmp.eq.s32.totalorder %v196, 0
        %vm1035 = vcmp.eq.s32.totalorder %v197, 0
        %vm1036 = vcmp.eq.s32.totalorder %v198, 0
        %vm1037 = vcmp.eq.s32.totalorder %v199, 0
        %vm1038 = vcmp.eq.s32.totalorder %v200, 0
        %vm1039 = vcmp.eq.s32.totalorder %v201, 0
        %vm1040 = vcmp.eq.s32.totalorder %v202, 0
        %vm1041 = vcmp.eq.s32.totalorder %v203, 0
        %vm1042 = vcmp.eq.s32.totalorder %v204, 0
        %vm1043 = vcmp.eq.s32.totalorder %v205, 0
        %vm1044 = vcmp.eq.s32.totalorder %v206, 0
        %vm1045 = vcmp.eq.s32.totalorder %v207, 0
        %vm1046 = vcmp.eq.s32.totalorder %v208, 0
        %vm1047 = vcmp.eq.s32.totalorder %v209, 0
        %vm1048 = vcmp.eq.s32.totalorder %v210, 0
        %vm1049 = vcmp.eq.s32.totalorder %v211, 0
        %vm1050 = vcmp.eq.s32.totalorder %v212, 0
        %vm1051 = vcmp.eq.s32.totalorder %v213, 0
        %vm1052 = vcmp.eq.s32.totalorder %v214, 0
        %vm1053 = vcmp.eq.s32.totalorder %v215, 0
        %vm1054 = vcmp.eq.s32.totalorder %v216, 0
        %vm1055 = vcmp.eq.s32.totalorder %v217, 0
        %vm1056 = vcmp.eq.s32.totalorder %v218, 0
        %vm1057 = vcmp.eq.s32.totalorder %v219, 0
        %v1058 = vsel %vm1010, 1, 0
        %v1059 = vsel %vm1011, 1, 0
        %v1060 = vsel %vm1012, 1, 0
        %v1061 = vsel %vm1013, 1, 0
        %v1062 = vsel %vm1014, 1, 0
        %v1063 = vsel %vm1015, 1, 0
        %v1064 = vsel %vm1016, 1, 0
        %v1065 = vsel %vm1017, 1, 0
        %v1066 = vsel %vm1018, 1, 0
        %v1067 = vsel %vm1019, 1, 0
        %v1068 = vsel %vm1020, 1, 0
        %v1069 = vsel %vm1021, 1, 0
        %v1070 = vsel %vm1022, 1, 0
        %v1071 = vsel %vm1023, 1, 0
        %v1072 = vsel %vm1024, 1, 0
        %v1073 = vsel %vm1025, 1, 0
        %v1074 = vsel %vm1026, 1, 0
        %v1075 = vsel %vm1027, 1, 0
        %v1076 = vsel %vm1028, 1, 0
        %v1077 = vsel %vm1029, 1, 0
        %v1078 = vsel %vm1030, 1, 0
        %v1079 = vsel %vm1031, 1, 0
        %v1080 = vsel %vm1032, 1, 0
        %v1081 = vsel %vm1033, 1, 0
        %v1082 = vsel %vm1034, 1, 0
        %v1083 = vsel %vm1035, 1, 0
        %v1084 = vsel %vm1036, 1, 0
        %v1085 = vsel %vm1037, 1, 0
        %v1086 = vsel %vm1038, 1, 0
        %v1087 = vsel %vm1039, 1, 0
        %v1088 = vsel %vm1040, 1, 0
        %v1089 = vsel %vm1041, 1, 0
        %v1090 = vsel %vm1042, 1, 0
        %v1091 = vsel %vm1043, 1, 0
        %v1092 = vsel %vm1044, 1, 0
        %v1093 = vsel %vm1045, 1, 0
        %v1094 = vsel %vm1046, 1, 0
        %v1095 = vsel %vm1047, 1, 0
        %v1096 = vsel %vm1048, 1, 0
        %v1097 = vsel %vm1049, 1, 0
        %v1098 = vsel %vm1050, 1, 0
        %v1099 = vsel %vm1051, 1, 0
        %v1100 = vsel %vm1052, 1, 0
        %v1101 = vsel %vm1053, 1, 0
        %v1102 = vsel %vm1054, 1, 0
        %v1103 = vsel %vm1055, 1, 0
        %v1104 = vsel %vm1056, 1, 0
        %v1105 = vsel %vm1057, 1, 0
        %1106 = vset.pattern.permute.xlu0 1
        %1107 = vperm.xlu0 %1106, %v1058
        %v1108 = vpop.permute.xlu0 %1107
        %1109 = vset.pattern.permute.xlu0 1
        %1110 = vperm.xlu0 %1109, %v1059
        %v1111 = vpop.permute.xlu0 %1110
        %1112 = vset.pattern.permute.xlu0 1
        %1113 = vperm.xlu0 %1112, %v1060
        %v1114 = vpop.permute.xlu0 %1113
        %1115 = vset.pattern.permute.xlu0 1
        %1116 = vperm.xlu0 %1115, %v1061
        %v1117 = vpop.permute.xlu0 %1116
        %1118 = vset.pattern.permute.xlu0 1
        %1119 = vperm.xlu0 %1118, %v1062
        %v1120 = vpop.permute.xlu0 %1119
        %1121 = vset.pattern.permute.xlu0 1
        %1122 = vperm.xlu0 %1121, %v1063
        %v1123 = vpop.permute.xlu0 %1122
        %1124 = vset.pattern.permute.xlu0 1
        %1125 = vperm.xlu0 %1124, %v1064
        %v1126 = vpop.permute.xlu0 %1125
        %1127 = vset.pattern.permute.xlu0 1
        %1128 = vperm.xlu0 %1127, %v1065
        %v1129 = vpop.permute.xlu0 %1128
        %1130 = vset.pattern.permute.xlu0 1
        %1131 = vperm.xlu0 %1130, %v1066
        %v1132 = vpop.permute.xlu0 %1131
        %1133 = vset.pattern.permute.xlu0 1
        %1134 = vperm.xlu0 %1133, %v1067
        %v1135 = vpop.permute.xlu0 %1134
        %1136 = vset.pattern.permute.xlu0 1
        %1137 = vperm.xlu0 %1136, %v1068
        %v1138 = vpop.permute.xlu0 %1137
        %1139 = vset.pattern.permute.xlu0 1
        %1140 = vperm.xlu0 %1139, %v1069
        %v1141 = vpop.permute.xlu0 %1140
        %1142 = vset.pattern.permute.xlu0 1
        %1143 = vperm.xlu0 %1142, %v1070
        %v1144 = vpop.permute.xlu0 %1143
        %1145 = vset.pattern.permute.xlu0 1
        %1146 = vperm.xlu0 %1145, %v1071
        %v1147 = vpop.permute.xlu0 %1146
        %1148 = vset.pattern.permute.xlu0 1
        %1149 = vperm.xlu0 %1148, %v1072
        %v1150 = vpop.permute.xlu0 %1149
        %1151 = vset.pattern.permute.xlu0 1
        %1152 = vperm.xlu0 %1151, %v1073
        %v1153 = vpop.permute.xlu0 %1152
        %1154 = vset.pattern.permute.xlu0 1
        %1155 = vperm.xlu0 %1154, %v1074
        %v1156 = vpop.permute.xlu0 %1155
        %1157 = vset.pattern.permute.xlu0 1
        %1158 = vperm.xlu0 %1157, %v1075
        %v1159 = vpop.permute.xlu0 %1158
        %1160 = vset.pattern.permute.xlu0 1
        %1161 = vperm.xlu0 %1160, %v1076
        %v1162 = vpop.permute.xlu0 %1161
        %1163 = vset.pattern.permute.xlu0 1
        %1164 = vperm.xlu0 %1163, %v1077
        %v1165 = vpop.permute.xlu0 %1164
        %1166 = vset.pattern.permute.xlu0 1
        %1167 = vperm.xlu0 %1166, %v1078
        %v1168 = vpop.permute.xlu0 %1167
        %1169 = vset.pattern.permute.xlu0 1
        %1170 = vperm.xlu0 %1169, %v1079
        %v1171 = vpop.permute.xlu0 %1170
        %1172 = vset.pattern.permute.xlu0 1
        %1173 = vperm.xlu0 %1172, %v1080
        %v1174 = vpop.permute.xlu0 %1173
        %1175 = vset.pattern.permute.xlu0 1
        %1176 = vperm.xlu0 %1175, %v1081
        %v1177 = vpop.permute.xlu0 %1176
        %1178 = vset.pattern.permute.xlu0 1
        %1179 = vperm.xlu0 %1178, %v1082
        %v1180 = vpop.permute.xlu0 %1179
        %1181 = vset.pattern.permute.xlu0 1
        %1182 = vperm.xlu0 %1181, %v1083
        %v1183 = vpop.permute.xlu0 %1182
        %1184 = vset.pattern.permute.xlu0 1
        %1185 = vperm.xlu0 %1184, %v1084
        %v1186 = vpop.permute.xlu0 %1185
        %1187 = vset.pattern.permute.xlu0 1
        %1188 = vperm.xlu0 %1187, %v1085
        %v1189 = vpop.permute.xlu0 %1188
        %1190 = vset.pattern.permute.xlu0 1
        %1191 = vperm.xlu0 %1190, %v1086
        %v1192 = vpop.permute.xlu0 %1191
        %1193 = vset.pattern.permute.xlu0 1
        %1194 = vperm.xlu0 %1193, %v1087
        %v1195 = vpop.permute.xlu0 %1194
        %1196 = vset.pattern.permute.xlu0 1
        %1197 = vperm.xlu0 %1196, %v1088
        %v1198 = vpop.permute.xlu0 %1197
        %1199 = vset.pattern.permute.xlu0 1
        %1200 = vperm.xlu0 %1199, %v1089
        %v1201 = vpop.permute.xlu0 %1200
        %1202 = vset.pattern.permute.xlu0 1
        %1203 = vperm.xlu0 %1202, %v1090
        %v1204 = vpop.permute.xlu0 %1203
        %1205 = vset.pattern.permute.xlu0 1
        %1206 = vperm.xlu0 %1205, %v1091
        %v1207 = vpop.permute.xlu0 %1206
        %1208 = vset.pattern.permute.xlu0 1
        %1209 = vperm.xlu0 %1208, %v1092
        %v1210 = vpop.permute.xlu0 %1209
        %1211 = vset.pattern.permute.xlu0 1
        %1212 = vperm.xlu0 %1211, %v1093
        %v1213 = vpop.permute.xlu0 %1212
        %1214 = vset.pattern.permute.xlu0 1
        %1215 = vperm.xlu0 %1214, %v1094
        %v1216 = vpop.permute.xlu0 %1215
        %1217 = vset.pattern.permute.xlu0 1
        %1218 = vperm.xlu0 %1217, %v1095
        %v1219 = vpop.permute.xlu0 %1218
        %1220 = vset.pattern.permute.xlu0 1
        %1221 = vperm.xlu0 %1220, %v1096
        %v1222 = vpop.permute.xlu0 %1221
        %1223 = vset.pattern.permute.xlu0 1
        %1224 = vperm.xlu0 %1223, %v1097
        %v1225 = vpop.permute.xlu0 %1224
        %1226 = vset.pattern.permute.xlu0 1
        %1227 = vperm.xlu0 %1226, %v1098
        %v1228 = vpop.permute.xlu0 %1227
        %1229 = vset.pattern.permute.xlu0 1
        %1230 = vperm.xlu0 %1229, %v1099
        %v1231 = vpop.permute.xlu0 %1230
        %1232 = vset.pattern.permute.xlu0 1
        %1233 = vperm.xlu0 %1232, %v1100
        %v1234 = vpop.permute.xlu0 %1233
        %1235 = vset.pattern.permute.xlu0 1
        %1236 = vperm.xlu0 %1235, %v1101
        %v1237 = vpop.permute.xlu0 %1236
        %1238 = vset.pattern.permute.xlu0 1
        %1239 = vperm.xlu0 %1238, %v1102
        %v1240 = vpop.permute.xlu0 %1239
        %1241 = vset.pattern.permute.xlu0 1
        %1242 = vperm.xlu0 %1241, %v1103
        %v1243 = vpop.permute.xlu0 %1242
        %1244 = vset.pattern.permute.xlu0 1
        %1245 = vperm.xlu0 %1244, %v1104
        %v1246 = vpop.permute.xlu0 %1245
        %1247 = vset.pattern.permute.xlu0 1
        %1248 = vperm.xlu0 %1247, %v1105
        %v1249 = vpop.permute.xlu0 %1248
        %vm1250 = vcmp.eq.s32.totalorder %v1108, 1
        %vm1251 = vcmp.eq.s32.totalorder %v1111, 1
        %vm1252 = vcmp.eq.s32.totalorder %v1114, 1
        %vm1253 = vcmp.eq.s32.totalorder %v1117, 1
        %vm1254 = vcmp.eq.s32.totalorder %v1120, 1
        %vm1255 = vcmp.eq.s32.totalorder %v1123, 1
        %vm1256 = vcmp.eq.s32.totalorder %v1126, 1
        %vm1257 = vcmp.eq.s32.totalorder %v1129, 1
        %vm1258 = vcmp.eq.s32.totalorder %v1132, 1
        %vm1259 = vcmp.eq.s32.totalorder %v1135, 1
        %vm1260 = vcmp.eq.s32.totalorder %v1138, 1
        %vm1261 = vcmp.eq.s32.totalorder %v1141, 1
        %vm1262 = vcmp.eq.s32.totalorder %v1144, 1
        %vm1263 = vcmp.eq.s32.totalorder %v1147, 1
        %vm1264 = vcmp.eq.s32.totalorder %v1150, 1
        %vm1265 = vcmp.eq.s32.totalorder %v1153, 1
        %vm1266 = vcmp.eq.s32.totalorder %v1156, 1
        %vm1267 = vcmp.eq.s32.totalorder %v1159, 1
        %vm1268 = vcmp.eq.s32.totalorder %v1162, 1
        %vm1269 = vcmp.eq.s32.totalorder %v1165, 1
        %vm1270 = vcmp.eq.s32.totalorder %v1168, 1
        %vm1271 = vcmp.eq.s32.totalorder %v1171, 1
        %vm1272 = vcmp.eq.s32.totalorder %v1174, 1
        %vm1273 = vcmp.eq.s32.totalorder %v1177, 1
        %vm1274 = vcmp.eq.s32.totalorder %v1180, 1
        %vm1275 = vcmp.eq.s32.totalorder %v1183, 1
        %vm1276 = vcmp.eq.s32.totalorder %v1186, 1
        %vm1277 = vcmp.eq.s32.totalorder %v1189, 1
        %vm1278 = vcmp.eq.s32.totalorder %v1192, 1
        %vm1279 = vcmp.eq.s32.totalorder %v1195, 1
        %vm1280 = vcmp.eq.s32.totalorder %v1198, 1
        %vm1281 = vcmp.eq.s32.totalorder %v1201, 1
        %vm1282 = vcmp.eq.s32.totalorder %v1204, 1
        %vm1283 = vcmp.eq.s32.totalorder %v1207, 1
        %vm1284 = vcmp.eq.s32.totalorder %v1210, 1
        %vm1285 = vcmp.eq.s32.totalorder %v1213, 1
        %vm1286 = vcmp.eq.s32.totalorder %v1216, 1
        %vm1287 = vcmp.eq.s32.totalorder %v1219, 1
        %vm1288 = vcmp.eq.s32.totalorder %v1222, 1
        %vm1289 = vcmp.eq.s32.totalorder %v1225, 1
        %vm1290 = vcmp.eq.s32.totalorder %v1228, 1
        %vm1291 = vcmp.eq.s32.totalorder %v1231, 1
        %vm1292 = vcmp.eq.s32.totalorder %v1234, 1
        %vm1293 = vcmp.eq.s32.totalorder %v1237, 1
        %vm1294 = vcmp.eq.s32.totalorder %v1240, 1
        %vm1295 = vcmp.eq.s32.totalorder %v1243, 1
        %vm1296 = vcmp.eq.s32.totalorder %v1246, 1
        %vm1297 = vcmp.eq.s32.totalorder %v1249, 1
        %v1298 = vperm.slane %v1009, 0
        %v1299 = vsel %vm1250, %v1298, 0.0
        %v1300 = vsel %vm1251, %v1298, 0.0
        %v1301 = vsel %vm1252, %v1298, 0.0
        %v1302 = vsel %vm1253, %v1298, 0.0
        %v1303 = vsel %vm1254, %v1298, 0.0
        %v1304 = vsel %vm1255, %v1298, 0.0
        %v1305 = vsel %vm1256, %v1298, 0.0
        %v1306 = vsel %vm1257, %v1298, 0.0
        %v1307 = vsel %vm1258, %v1298, 0.0
        %v1308 = vsel %vm1259, %v1298, 0.0
        %v1309 = vsel %vm1260, %v1298, 0.0
        %v1310 = vsel %vm1261, %v1298, 0.0
        %v1311 = vsel %vm1262, %v1298, 0.0
        %v1312 = vsel %vm1263, %v1298, 0.0
        %v1313 = vsel %vm1264, %v1298, 0.0
        %v1314 = vsel %vm1265, %v1298, 0.0
        %v1315 = vsel %vm1266, %v1298, 0.0
        %v1316 = vsel %vm1267, %v1298, 0.0
        %v1317 = vsel %vm1268, %v1298, 0.0
        %v1318 = vsel %vm1269, %v1298, 0.0
        %v1319 = vsel %vm1270, %v1298, 0.0
        %v1320 = vsel %vm1271, %v1298, 0.0
        %v1321 = vsel %vm1272, %v1298, 0.0
        %v1322 = vsel %vm1273, %v1298, 0.0
        %v1323 = vsel %vm1274, %v1298, 0.0
        %v1324 = vsel %vm1275, %v1298, 0.0
        %v1325 = vsel %vm1276, %v1298, 0.0
        %v1326 = vsel %vm1277, %v1298, 0.0
        %v1327 = vsel %vm1278, %v1298, 0.0
        %v1328 = vsel %vm1279, %v1298, 0.0
        %v1329 = vsel %vm1280, %v1298, 0.0
        %v1330 = vsel %vm1281, %v1298, 0.0
        %v1331 = vsel %vm1282, %v1298, 0.0
        %v1332 = vsel %vm1283, %v1298, 0.0
        %v1333 = vsel %vm1284, %v1298, 0.0
        %v1334 = vsel %vm1285, %v1298, 0.0
        %v1335 = vsel %vm1286, %v1298, 0.0
        %v1336 = vsel %vm1287, %v1298, 0.0
        %v1337 = vsel %vm1288, %v1298, 0.0
        %v1338 = vsel %vm1289, %v1298, 0.0
        %v1339 = vsel %vm1290, %v1298, 0.0
        %v1340 = vsel %vm1291, %v1298, 0.0
        %v1341 = vsel %vm1292, %v1298, 0.0
        %v1342 = vsel %vm1293, %v1298, 0.0
        %v1343 = vsel %vm1294, %v1298, 0.0
        %v1344 = vsel %vm1295, %v1298, 0.0
        %v1345 = vsel %vm1296, %v1298, 0.0
        %v1346 = vsel %vm1297, %v1298, 0.0
        %vm1347 = vcmp.eq.s32.totalorder %v172, 1
        %vm1348 = vcmp.eq.s32.totalorder %v173, 1
        %vm1349 = vcmp.eq.s32.totalorder %v174, 1
        %vm1350 = vcmp.eq.s32.totalorder %v175, 1
        %vm1351 = vcmp.eq.s32.totalorder %v176, 1
        %vm1352 = vcmp.eq.s32.totalorder %v177, 1
        %vm1353 = vcmp.eq.s32.totalorder %v178, 1
        %vm1354 = vcmp.eq.s32.totalorder %v179, 1
        %vm1355 = vcmp.eq.s32.totalorder %v180, 1
        %vm1356 = vcmp.eq.s32.totalorder %v181, 1
        %vm1357 = vcmp.eq.s32.totalorder %v182, 1
        %vm1358 = vcmp.eq.s32.totalorder %v183, 1
        %vm1359 = vcmp.eq.s32.totalorder %v184, 1
        %vm1360 = vcmp.eq.s32.totalorder %v185, 1
        %vm1361 = vcmp.eq.s32.totalorder %v186, 1
        %vm1362 = vcmp.eq.s32.totalorder %v187, 1
        %vm1363 = vcmp.eq.s32.totalorder %v188, 1
        %vm1364 = vcmp.eq.s32.totalorder %v189, 1
        %vm1365 = vcmp.eq.s32.totalorder %v190, 1
        %vm1366 = vcmp.eq.s32.totalorder %v191, 1
        %vm1367 = vcmp.eq.s32.totalorder %v192, 1
        %vm1368 = vcmp.eq.s32.totalorder %v193, 1
        %vm1369 = vcmp.eq.s32.totalorder %v194, 1
        %vm1370 = vcmp.eq.s32.totalorder %v195, 1
        %vm1371 = vcmp.eq.s32.totalorder %v196, 1
        %vm1372 = vcmp.eq.s32.totalorder %v197, 1
        %vm1373 = vcmp.eq.s32.totalorder %v198, 1
        %vm1374 = vcmp.eq.s32.totalorder %v199, 1
        %vm1375 = vcmp.eq.s32.totalorder %v200, 1
        %vm1376 = vcmp.eq.s32.totalorder %v201, 1
        %vm1377 = vcmp.eq.s32.totalorder %v202, 1
        %vm1378 = vcmp.eq.s32.totalorder %v203, 1
        %vm1379 = vcmp.eq.s32.totalorder %v204, 1
        %vm1380 = vcmp.eq.s32.totalorder %v205, 1
        %vm1381 = vcmp.eq.s32.totalorder %v206, 1
        %vm1382 = vcmp.eq.s32.totalorder %v207, 1
        %vm1383 = vcmp.eq.s32.totalorder %v208, 1
        %vm1384 = vcmp.eq.s32.totalorder %v209, 1
        %vm1385 = vcmp.eq.s32.totalorder %v210, 1
        %vm1386 = vcmp.eq.s32.totalorder %v211, 1
        %vm1387 = vcmp.eq.s32.totalorder %v212, 1
        %vm1388 = vcmp.eq.s32.totalorder %v213, 1
        %vm1389 = vcmp.eq.s32.totalorder %v214, 1
        %vm1390 = vcmp.eq.s32.totalorder %v215, 1
        %vm1391 = vcmp.eq.s32.totalorder %v216, 1
        %vm1392 = vcmp.eq.s32.totalorder %v217, 1
        %vm1393 = vcmp.eq.s32.totalorder %v218, 1
        %vm1394 = vcmp.eq.s32.totalorder %v219, 1
        %v1395 = vsel %vm1347, 1, 0
        %v1396 = vsel %vm1348, 1, 0
        %v1397 = vsel %vm1349, 1, 0
        %v1398 = vsel %vm1350, 1, 0
        %v1399 = vsel %vm1351, 1, 0
        %v1400 = vsel %vm1352, 1, 0
        %v1401 = vsel %vm1353, 1, 0
        %v1402 = vsel %vm1354, 1, 0
        %v1403 = vsel %vm1355, 1, 0
        %v1404 = vsel %vm1356, 1, 0
        %v1405 = vsel %vm1357, 1, 0
        %v1406 = vsel %vm1358, 1, 0
        %v1407 = vsel %vm1359, 1, 0
        %v1408 = vsel %vm1360, 1, 0
        %v1409 = vsel %vm1361, 1, 0
        %v1410 = vsel %vm1362, 1, 0
        %v1411 = vsel %vm1363, 1, 0
        %v1412 = vsel %vm1364, 1, 0
        %v1413 = vsel %vm1365, 1, 0
        %v1414 = vsel %vm1366, 1, 0
        %v1415 = vsel %vm1367, 1, 0
        %v1416 = vsel %vm1368, 1, 0
        %v1417 = vsel %vm1369, 1, 0
        %v1418 = vsel %vm1370, 1, 0
        %v1419 = vsel %vm1371, 1, 0
        %v1420 = vsel %vm1372, 1, 0
        %v1421 = vsel %vm1373, 1, 0
        %v1422 = vsel %vm1374, 1, 0
        %v1423 = vsel %vm1375, 1, 0
        %v1424 = vsel %vm1376, 1, 0
        %v1425 = vsel %vm1377, 1, 0
        %v1426 = vsel %vm1378, 1, 0
        %v1427 = vsel %vm1379, 1, 0
        %v1428 = vsel %vm1380, 1, 0
        %v1429 = vsel %vm1381, 1, 0
        %v1430 = vsel %vm1382, 1, 0
        %v1431 = vsel %vm1383, 1, 0
        %v1432 = vsel %vm1384, 1, 0
        %v1433 = vsel %vm1385, 1, 0
        %v1434 = vsel %vm1386, 1, 0
        %v1435 = vsel %vm1387, 1, 0
        %v1436 = vsel %vm1388, 1, 0
        %v1437 = vsel %vm1389, 1, 0
        %v1438 = vsel %vm1390, 1, 0
        %v1439 = vsel %vm1391, 1, 0
        %v1440 = vsel %vm1392, 1, 0
        %v1441 = vsel %vm1393, 1, 0
        %v1442 = vsel %vm1394, 1, 0
        %1443 = vset.pattern.permute.xlu0 1
        %1444 = vperm.xlu0 %1443, %v1395
        %v1445 = vpop.permute.xlu0 %1444
        %1446 = vset.pattern.permute.xlu0 1
        %1447 = vperm.xlu0 %1446, %v1396
        %v1448 = vpop.permute.xlu0 %1447
        %1449 = vset.pattern.permute.xlu0 1
        %1450 = vperm.xlu0 %1449, %v1397
        %v1451 = vpop.permute.xlu0 %1450
        %1452 = vset.pattern.permute.xlu0 1
        %1453 = vperm.xlu0 %1452, %v1398
        %v1454 = vpop.permute.xlu0 %1453
        %1455 = vset.pattern.permute.xlu0 1
        %1456 = vperm.xlu0 %1455, %v1399
        %v1457 = vpop.permute.xlu0 %1456
        %1458 = vset.pattern.permute.xlu0 1
        %1459 = vperm.xlu0 %1458, %v1400
        %v1460 = vpop.permute.xlu0 %1459
        %1461 = vset.pattern.permute.xlu0 1
        %1462 = vperm.xlu0 %1461, %v1401
        %v1463 = vpop.permute.xlu0 %1462
        %1464 = vset.pattern.permute.xlu0 1
        %1465 = vperm.xlu0 %1464, %v1402
        %v1466 = vpop.permute.xlu0 %1465
        %1467 = vset.pattern.permute.xlu0 1
        %1468 = vperm.xlu0 %1467, %v1403
        %v1469 = vpop.permute.xlu0 %1468
        %1470 = vset.pattern.permute.xlu0 1
        %1471 = vperm.xlu0 %1470, %v1404
        %v1472 = vpop.permute.xlu0 %1471
        %1473 = vset.pattern.permute.xlu0 1
        %1474 = vperm.xlu0 %1473, %v1405
        %v1475 = vpop.permute.xlu0 %1474
        %1476 = vset.pattern.permute.xlu0 1
        %1477 = vperm.xlu0 %1476, %v1406
        %v1478 = vpop.permute.xlu0 %1477
        %1479 = vset.pattern.permute.xlu0 1
        %1480 = vperm.xlu0 %1479, %v1407
        %v1481 = vpop.permute.xlu0 %1480
        %1482 = vset.pattern.permute.xlu0 1
        %1483 = vperm.xlu0 %1482, %v1408
        %v1484 = vpop.permute.xlu0 %1483
        %1485 = vset.pattern.permute.xlu0 1
        %1486 = vperm.xlu0 %1485, %v1409
        %v1487 = vpop.permute.xlu0 %1486
        %1488 = vset.pattern.permute.xlu0 1
        %1489 = vperm.xlu0 %1488, %v1410
        %v1490 = vpop.permute.xlu0 %1489
        %1491 = vset.pattern.permute.xlu0 1
        %1492 = vperm.xlu0 %1491, %v1411
        %v1493 = vpop.permute.xlu0 %1492
        %1494 = vset.pattern.permute.xlu0 1
        %1495 = vperm.xlu0 %1494, %v1412
        %v1496 = vpop.permute.xlu0 %1495
        %1497 = vset.pattern.permute.xlu0 1
        %1498 = vperm.xlu0 %1497, %v1413
        %v1499 = vpop.permute.xlu0 %1498
        %1500 = vset.pattern.permute.xlu0 1
        %1501 = vperm.xlu0 %1500, %v1414
        %v1502 = vpop.permute.xlu0 %1501
        %1503 = vset.pattern.permute.xlu0 1
        %1504 = vperm.xlu0 %1503, %v1415
        %v1505 = vpop.permute.xlu0 %1504
        %1506 = vset.pattern.permute.xlu0 1
        %1507 = vperm.xlu0 %1506, %v1416
        %v1508 = vpop.permute.xlu0 %1507
        %1509 = vset.pattern.permute.xlu0 1
        %1510 = vperm.xlu0 %1509, %v1417
        %v1511 = vpop.permute.xlu0 %1510
        %1512 = vset.pattern.permute.xlu0 1
        %1513 = vperm.xlu0 %1512, %v1418
        %v1514 = vpop.permute.xlu0 %1513
        %1515 = vset.pattern.permute.xlu0 1
        %1516 = vperm.xlu0 %1515, %v1419
        %v1517 = vpop.permute.xlu0 %1516
        %1518 = vset.pattern.permute.xlu0 1
        %1519 = vperm.xlu0 %1518, %v1420
        %v1520 = vpop.permute.xlu0 %1519
        %1521 = vset.pattern.permute.xlu0 1
        %1522 = vperm.xlu0 %1521, %v1421
        %v1523 = vpop.permute.xlu0 %1522
        %1524 = vset.pattern.permute.xlu0 1
        %1525 = vperm.xlu0 %1524, %v1422
        %v1526 = vpop.permute.xlu0 %1525
        %1527 = vset.pattern.permute.xlu0 1
        %1528 = vperm.xlu0 %1527, %v1423
        %v1529 = vpop.permute.xlu0 %1528
        %1530 = vset.pattern.permute.xlu0 1
        %1531 = vperm.xlu0 %1530, %v1424
        %v1532 = vpop.permute.xlu0 %1531
        %1533 = vset.pattern.permute.xlu0 1
        %1534 = vperm.xlu0 %1533, %v1425
        %v1535 = vpop.permute.xlu0 %1534
        %1536 = vset.pattern.permute.xlu0 1
        %1537 = vperm.xlu0 %1536, %v1426
        %v1538 = vpop.permute.xlu0 %1537
        %1539 = vset.pattern.permute.xlu0 1
        %1540 = vperm.xlu0 %1539, %v1427
        %v1541 = vpop.permute.xlu0 %1540
        %1542 = vset.pattern.permute.xlu0 1
        %1543 = vperm.xlu0 %1542, %v1428
        %v1544 = vpop.permute.xlu0 %1543
        %1545 = vset.pattern.permute.xlu0 1
        %1546 = vperm.xlu0 %1545, %v1429
        %v1547 = vpop.permute.xlu0 %1546
        %1548 = vset.pattern.permute.xlu0 1
        %1549 = vperm.xlu0 %1548, %v1430
        %v1550 = vpop.permute.xlu0 %1549
        %1551 = vset.pattern.permute.xlu0 1
        %1552 = vperm.xlu0 %1551, %v1431
        %v1553 = vpop.permute.xlu0 %1552
        %1554 = vset.pattern.permute.xlu0 1
        %1555 = vperm.xlu0 %1554, %v1432
        %v1556 = vpop.permute.xlu0 %1555
        %1557 = vset.pattern.permute.xlu0 1
        %1558 = vperm.xlu0 %1557, %v1433
        %v1559 = vpop.permute.xlu0 %1558
        %1560 = vset.pattern.permute.xlu0 1
        %1561 = vperm.xlu0 %1560, %v1434
        %v1562 = vpop.permute.xlu0 %1561
        %1563 = vset.pattern.permute.xlu0 1
        %1564 = vperm.xlu0 %1563, %v1435
        %v1565 = vpop.permute.xlu0 %1564
        %1566 = vset.pattern.permute.xlu0 1
        %1567 = vperm.xlu0 %1566, %v1436
        %v1568 = vpop.permute.xlu0 %1567
        %1569 = vset.pattern.permute.xlu0 1
        %1570 = vperm.xlu0 %1569, %v1437
        %v1571 = vpop.permute.xlu0 %1570
        %1572 = vset.pattern.permute.xlu0 1
        %1573 = vperm.xlu0 %1572, %v1438
        %v1574 = vpop.permute.xlu0 %1573
        %1575 = vset.pattern.permute.xlu0 1
        %1576 = vperm.xlu0 %1575, %v1439
        %v1577 = vpop.permute.xlu0 %1576
        %1578 = vset.pattern.permute.xlu0 1
        %1579 = vperm.xlu0 %1578, %v1440
        %v1580 = vpop.permute.xlu0 %1579
        %1581 = vset.pattern.permute.xlu0 1
        %1582 = vperm.xlu0 %1581, %v1441
        %v1583 = vpop.permute.xlu0 %1582
        %1584 = vset.pattern.permute.xlu0 1
        %1585 = vperm.xlu0 %1584, %v1442
        %v1586 = vpop.permute.xlu0 %1585
        %vm1587 = vcmp.eq.s32.totalorder %v1445, 1
        %vm1588 = vcmp.eq.s32.totalorder %v1448, 1
        %vm1589 = vcmp.eq.s32.totalorder %v1451, 1
        %vm1590 = vcmp.eq.s32.totalorder %v1454, 1
        %vm1591 = vcmp.eq.s32.totalorder %v1457, 1
        %vm1592 = vcmp.eq.s32.totalorder %v1460, 1
        %vm1593 = vcmp.eq.s32.totalorder %v1463, 1
        %vm1594 = vcmp.eq.s32.totalorder %v1466, 1
        %vm1595 = vcmp.eq.s32.totalorder %v1469, 1
        %vm1596 = vcmp.eq.s32.totalorder %v1472, 1
        %vm1597 = vcmp.eq.s32.totalorder %v1475, 1
        %vm1598 = vcmp.eq.s32.totalorder %v1478, 1
        %vm1599 = vcmp.eq.s32.totalorder %v1481, 1
        %vm1600 = vcmp.eq.s32.totalorder %v1484, 1
        %vm1601 = vcmp.eq.s32.totalorder %v1487, 1
        %vm1602 = vcmp.eq.s32.totalorder %v1490, 1
        %vm1603 = vcmp.eq.s32.totalorder %v1493, 1
        %vm1604 = vcmp.eq.s32.totalorder %v1496, 1
        %vm1605 = vcmp.eq.s32.totalorder %v1499, 1
        %vm1606 = vcmp.eq.s32.totalorder %v1502, 1
        %vm1607 = vcmp.eq.s32.totalorder %v1505, 1
        %vm1608 = vcmp.eq.s32.totalorder %v1508, 1
        %vm1609 = vcmp.eq.s32.totalorder %v1511, 1
        %vm1610 = vcmp.eq.s32.totalorder %v1514, 1
        %vm1611 = vcmp.eq.s32.totalorder %v1517, 1
        %vm1612 = vcmp.eq.s32.totalorder %v1520, 1
        %vm1613 = vcmp.eq.s32.totalorder %v1523, 1
        %vm1614 = vcmp.eq.s32.totalorder %v1526, 1
        %vm1615 = vcmp.eq.s32.totalorder %v1529, 1
        %vm1616 = vcmp.eq.s32.totalorder %v1532, 1
        %vm1617 = vcmp.eq.s32.totalorder %v1535, 1
        %vm1618 = vcmp.eq.s32.totalorder %v1538, 1
        %vm1619 = vcmp.eq.s32.totalorder %v1541, 1
        %vm1620 = vcmp.eq.s32.totalorder %v1544, 1
        %vm1621 = vcmp.eq.s32.totalorder %v1547, 1
        %vm1622 = vcmp.eq.s32.totalorder %v1550, 1
        %vm1623 = vcmp.eq.s32.totalorder %v1553, 1
        %vm1624 = vcmp.eq.s32.totalorder %v1556, 1
        %vm1625 = vcmp.eq.s32.totalorder %v1559, 1
        %vm1626 = vcmp.eq.s32.totalorder %v1562, 1
        %vm1627 = vcmp.eq.s32.totalorder %v1565, 1
        %vm1628 = vcmp.eq.s32.totalorder %v1568, 1
        %vm1629 = vcmp.eq.s32.totalorder %v1571, 1
        %vm1630 = vcmp.eq.s32.totalorder %v1574, 1
        %vm1631 = vcmp.eq.s32.totalorder %v1577, 1
        %vm1632 = vcmp.eq.s32.totalorder %v1580, 1
        %vm1633 = vcmp.eq.s32.totalorder %v1583, 1
        %vm1634 = vcmp.eq.s32.totalorder %v1586, 1
        %v1635 = vperm.slane %v1009, 1
        %v1636 = vsel %vm1587, %v1635, %v1299
        %v1637 = vsel %vm1588, %v1635, %v1300
        %v1638 = vsel %vm1589, %v1635, %v1301
        %v1639 = vsel %vm1590, %v1635, %v1302
        %v1640 = vsel %vm1591, %v1635, %v1303
        %v1641 = vsel %vm1592, %v1635, %v1304
        %v1642 = vsel %vm1593, %v1635, %v1305
        %v1643 = vsel %vm1594, %v1635, %v1306
        %v1644 = vsel %vm1595, %v1635, %v1307
        %v1645 = vsel %vm1596, %v1635, %v1308
        %v1646 = vsel %vm1597, %v1635, %v1309
        %v1647 = vsel %vm1598, %v1635, %v1310
        %v1648 = vsel %vm1599, %v1635, %v1311
        %v1649 = vsel %vm1600, %v1635, %v1312
        %v1650 = vsel %vm1601, %v1635, %v1313
        %v1651 = vsel %vm1602, %v1635, %v1314
        %v1652 = vsel %vm1603, %v1635, %v1315
        %v1653 = vsel %vm1604, %v1635, %v1316
        %v1654 = vsel %vm1605, %v1635, %v1317
        %v1655 = vsel %vm1606, %v1635, %v1318
        %v1656 = vsel %vm1607, %v1635, %v1319
        %v1657 = vsel %vm1608, %v1635, %v1320
        %v1658 = vsel %vm1609, %v1635, %v1321
        %v1659 = vsel %vm1610, %v1635, %v1322
        %v1660 = vsel %vm1611, %v1635, %v1323
        %v1661 = vsel %vm1612, %v1635, %v1324
        %v1662 = vsel %vm1613, %v1635, %v1325
        %v1663 = vsel %vm1614, %v1635, %v1326
        %v1664 = vsel %vm1615, %v1635, %v1327
        %v1665 = vsel %vm1616, %v1635, %v1328
        %v1666 = vsel %vm1617, %v1635, %v1329
        %v1667 = vsel %vm1618, %v1635, %v1330
        %v1668 = vsel %vm1619, %v1635, %v1331
        %v1669 = vsel %vm1620, %v1635, %v1332
        %v1670 = vsel %vm1621, %v1635, %v1333
        %v1671 = vsel %vm1622, %v1635, %v1334
        %v1672 = vsel %vm1623, %v1635, %v1335
        %v1673 = vsel %vm1624, %v1635, %v1336
        %v1674 = vsel %vm1625, %v1635, %v1337
        %v1675 = vsel %vm1626, %v1635, %v1338
        %v1676 = vsel %vm1627, %v1635, %v1339
        %v1677 = vsel %vm1628, %v1635, %v1340
        %v1678 = vsel %vm1629, %v1635, %v1341
        %v1679 = vsel %vm1630, %v1635, %v1342
        %v1680 = vsel %vm1631, %v1635, %v1343
        %v1681 = vsel %vm1632, %v1635, %v1344
        %v1682 = vsel %vm1633, %v1635, %v1345
        %v1683 = vsel %vm1634, %v1635, %v1346
        %1684 = vmatpush.msra.mxu0 %v960
        %1685 = vmatpush.msra.mxu0 %v959
        %1686 = vmatpush.msra.mxu0 %v958
        %1687 = vmatpush.msra.mxu0 %v957
        %1688 = vmatpush.msra.mxu0 %v956
        %1689 = vmatpush.msra.mxu0 %v955
        %1690 = vmatpush.msra.mxu0 %v954
        %1691 = vmatpush.msra.mxu0 %v953
        %1692 = vmatpush.msra.mxu0 %v952
        %1693 = vmatpush.msra.mxu0 %v951
        %1694 = vmatpush.msra.mxu0 %v950
        %1695 = vmatpush.msra.mxu0 %v949
        %1696 = vmatpush.msra.mxu0 %v948
        %1697 = vmatpush.msra.mxu0 %v947
        %1698 = vmatpush.msra.mxu0 %v946
        %1699 = vmatpush.msra.mxu0 %v945
        %1700 = vmatmul.f32.gmra.mxu0 %v753
        %v1701 = vpop.f32.mrf.mxu0
        %v1702 = vadd.f32 %v1636, %v1701
        %1703 = vmatmul.f32.gmra.mxu0 %v757
        %v1704 = vpop.f32.mrf.mxu0
        %v1705 = vadd.f32 %v1637, %v1704
        %1706 = vmatmul.f32.gmra.mxu0 %v761
        %v1707 = vpop.f32.mrf.mxu0
        %v1708 = vadd.f32 %v1638, %v1707
        %1709 = vmatmul.f32.gmra.mxu0 %v765
        %v1710 = vpop.f32.mrf.mxu0
        %v1711 = vadd.f32 %v1639, %v1710
        %1712 = vmatmul.f32.gmra.mxu0 %v769
        %v1713 = vpop.f32.mrf.mxu0
        %v1714 = vadd.f32 %v1640, %v1713
        %1715 = vmatmul.f32.gmra.mxu0 %v773
        %v1716 = vpop.f32.mrf.mxu0
        %v1717 = vadd.f32 %v1641, %v1716
        %1718 = vmatmul.f32.gmra.mxu0 %v777
        %v1719 = vpop.f32.mrf.mxu0
        %v1720 = vadd.f32 %v1642, %v1719
        %1721 = vmatmul.f32.gmra.mxu0 %v781
        %v1722 = vpop.f32.mrf.mxu0
        %v1723 = vadd.f32 %v1643, %v1722
        %1724 = vmatmul.f32.gmra.mxu0 %v785
        %v1725 = vpop.f32.mrf.mxu0
        %v1726 = vadd.f32 %v1644, %v1725
        %1727 = vmatmul.f32.gmra.mxu0 %v789
        %v1728 = vpop.f32.mrf.mxu0
        %v1729 = vadd.f32 %v1645, %v1728
        %1730 = vmatmul.f32.gmra.mxu0 %v793
        %v1731 = vpop.f32.mrf.mxu0
        %v1732 = vadd.f32 %v1646, %v1731
        %1733 = vmatmul.f32.gmra.mxu0 %v797
        %v1734 = vpop.f32.mrf.mxu0
        %v1735 = vadd.f32 %v1647, %v1734
        %1736 = vmatmul.f32.gmra.mxu0 %v801
        %v1737 = vpop.f32.mrf.mxu0
        %v1738 = vadd.f32 %v1648, %v1737
        %1739 = vmatmul.f32.gmra.mxu0 %v805
        %v1740 = vpop.f32.mrf.mxu0
        %v1741 = vadd.f32 %v1649, %v1740
        %1742 = vmatmul.f32.gmra.mxu0 %v809
        %v1743 = vpop.f32.mrf.mxu0
        %v1744 = vadd.f32 %v1650, %v1743
        %1745 = vmatmul.f32.gmra.mxu0 %v813
        %v1746 = vpop.f32.mrf.mxu0
        %v1747 = vadd.f32 %v1651, %v1746
        %1748 = vmatmul.f32.gmra.mxu0 %v817
        %v1749 = vpop.f32.mrf.mxu0
        %v1750 = vadd.f32 %v1652, %v1749
        %1751 = vmatmul.f32.gmra.mxu0 %v821
        %v1752 = vpop.f32.mrf.mxu0
        %v1753 = vadd.f32 %v1653, %v1752
        %1754 = vmatmul.f32.gmra.mxu0 %v825
        %v1755 = vpop.f32.mrf.mxu0
        %v1756 = vadd.f32 %v1654, %v1755
        %1757 = vmatmul.f32.gmra.mxu0 %v829
        %v1758 = vpop.f32.mrf.mxu0
        %v1759 = vadd.f32 %v1655, %v1758
        %1760 = vmatmul.f32.gmra.mxu0 %v833
        %v1761 = vpop.f32.mrf.mxu0
        %v1762 = vadd.f32 %v1656, %v1761
        %1763 = vmatmul.f32.gmra.mxu0 %v837
        %v1764 = vpop.f32.mrf.mxu0
        %v1765 = vadd.f32 %v1657, %v1764
        %1766 = vmatmul.f32.gmra.mxu0 %v841
        %v1767 = vpop.f32.mrf.mxu0
        %v1768 = vadd.f32 %v1658, %v1767
        %1769 = vmatmul.f32.gmra.mxu0 %v845
        %v1770 = vpop.f32.mrf.mxu0
        %v1771 = vadd.f32 %v1659, %v1770
        %1772 = vmatmul.f32.gmra.mxu0 %v849
        %v1773 = vpop.f32.mrf.mxu0
        %v1774 = vadd.f32 %v1660, %v1773
        %1775 = vmatmul.f32.gmra.mxu0 %v853
        %v1776 = vpop.f32.mrf.mxu0
        %v1777 = vadd.f32 %v1661, %v1776
        %1778 = vmatmul.f32.gmra.mxu0 %v857
        %v1779 = vpop.f32.mrf.mxu0
        %v1780 = vadd.f32 %v1662, %v1779
        %1781 = vmatmul.f32.gmra.mxu0 %v861
        %v1782 = vpop.f32.mrf.mxu0
        %v1783 = vadd.f32 %v1663, %v1782
        %1784 = vmatmul.f32.gmra.mxu0 %v865
        %v1785 = vpop.f32.mrf.mxu0
        %v1786 = vadd.f32 %v1664, %v1785
        %1787 = vmatmul.f32.gmra.mxu0 %v869
        %v1788 = vpop.f32.mrf.mxu0
        %v1789 = vadd.f32 %v1665, %v1788
        %1790 = vmatmul.f32.gmra.mxu0 %v873
        %v1791 = vpop.f32.mrf.mxu0
        %v1792 = vadd.f32 %v1666, %v1791
        %1793 = vmatmul.f32.gmra.mxu0 %v877
        %v1794 = vpop.f32.mrf.mxu0
        %v1795 = vadd.f32 %v1667, %v1794
        %1796 = vmatmul.f32.gmra.mxu0 %v881
        %v1797 = vpop.f32.mrf.mxu0
        %v1798 = vadd.f32 %v1668, %v1797
        %1799 = vmatmul.f32.gmra.mxu0 %v885
        %v1800 = vpop.f32.mrf.mxu0
        %v1801 = vadd.f32 %v1669, %v1800
        %1802 = vmatmul.f32.gmra.mxu0 %v889
        %v1803 = vpop.f32.mrf.mxu0
        %v1804 = vadd.f32 %v1670, %v1803
        %1805 = vmatmul.f32.gmra.mxu0 %v893
        %v1806 = vpop.f32.mrf.mxu0
        %v1807 = vadd.f32 %v1671, %v1806
        %1808 = vmatmul.f32.gmra.mxu0 %v897
        %v1809 = vpop.f32.mrf.mxu0
        %v1810 = vadd.f32 %v1672, %v1809
        %1811 = vmatmul.f32.gmra.mxu0 %v901
        %v1812 = vpop.f32.mrf.mxu0
        %v1813 = vadd.f32 %v1673, %v1812
        %1814 = vmatmul.f32.gmra.mxu0 %v905
        %v1815 = vpop.f32.mrf.mxu0
        %v1816 = vadd.f32 %v1674, %v1815
        %1817 = vmatmul.f32.gmra.mxu0 %v909
        %v1818 = vpop.f32.mrf.mxu0
        %v1819 = vadd.f32 %v1675, %v1818
        %1820 = vmatmul.f32.gmra.mxu0 %v913
        %v1821 = vpop.f32.mrf.mxu0
        %v1822 = vadd.f32 %v1676, %v1821
        %1823 = vmatmul.f32.gmra.mxu0 %v917
        %v1824 = vpop.f32.mrf.mxu0
        %v1825 = vadd.f32 %v1677, %v1824
        %1826 = vmatmul.f32.gmra.mxu0 %v921
        %v1827 = vpop.f32.mrf.mxu0
        %v1828 = vadd.f32 %v1678, %v1827
        %1829 = vmatmul.f32.gmra.mxu0 %v925
        %v1830 = vpop.f32.mrf.mxu0
        %v1831 = vadd.f32 %v1679, %v1830
        %1832 = vmatmul.f32.gmra.mxu0 %v929
        %v1833 = vpop.f32.mrf.mxu0
        %v1834 = vadd.f32 %v1680, %v1833
        %1835 = vmatmul.f32.gmra.mxu0 %v933
        %v1836 = vpop.f32.mrf.mxu0
        %v1837 = vadd.f32 %v1681, %v1836
        %1838 = vmatmul.f32.gmra.mxu0 %v937
        %v1839 = vpop.f32.mrf.mxu0
        %v1840 = vadd.f32 %v1682, %v1839
        %1841 = vmatmul.f32.gmra.mxu0 %v941
        %v1842 = vpop.f32.mrf.mxu0
        %v1843 = vadd.f32 %v1683, %v1842
        %1844 = vdwg.mxu0
        %1845 = vmatpush.msra.mxu0 %v976
        %1846 = vmatpush.msra.mxu0 %v975
        %1847 = vmatpush.msra.mxu0 %v974
        %1848 = vmatpush.msra.mxu0 %v973
        %1849 = vmatpush.msra.mxu0 %v972
        %1850 = vmatpush.msra.mxu0 %v971
        %1851 = vmatpush.msra.mxu0 %v970
        %1852 = vmatpush.msra.mxu0 %v969
        %1853 = vmatpush.msra.mxu0 %v968
        %1854 = vmatpush.msra.mxu0 %v967
        %1855 = vmatpush.msra.mxu0 %v966
        %1856 = vmatpush.msra.mxu0 %v965
        %1857 = vmatpush.msra.mxu0 %v964
        %1858 = vmatpush.msra.mxu0 %v963
        %1859 = vmatpush.msra.mxu0 %v962
        %1860 = vmatpush.msra.mxu0 %v961
        %1861 = vmatmul.f32.gmra.mxu0 %v754
        %v1862 = vpop.f32.mrf.mxu0
        %v1863 = vadd.f32 %v1702, %v1862
        %1864 = vmatmul.f32.gmra.mxu0 %v758
        %v1865 = vpop.f32.mrf.mxu0
        %v1866 = vadd.f32 %v1705, %v1865
        %1867 = vmatmul.f32.gmra.mxu0 %v762
        %v1868 = vpop.f32.mrf.mxu0
        %v1869 = vadd.f32 %v1708, %v1868
        %1870 = vmatmul.f32.gmra.mxu0 %v766
        %v1871 = vpop.f32.mrf.mxu0
        %v1872 = vadd.f32 %v1711, %v1871
        %1873 = vmatmul.f32.gmra.mxu0 %v770
        %v1874 = vpop.f32.mrf.mxu0
        %v1875 = vadd.f32 %v1714, %v1874
        %1876 = vmatmul.f32.gmra.mxu0 %v774
        %v1877 = vpop.f32.mrf.mxu0
        %v1878 = vadd.f32 %v1717, %v1877
        %1879 = vmatmul.f32.gmra.mxu0 %v778
        %v1880 = vpop.f32.mrf.mxu0
        %v1881 = vadd.f32 %v1720, %v1880
        %1882 = vmatmul.f32.gmra.mxu0 %v782
        %v1883 = vpop.f32.mrf.mxu0
        %v1884 = vadd.f32 %v1723, %v1883
        %1885 = vmatmul.f32.gmra.mxu0 %v786
        %v1886 = vpop.f32.mrf.mxu0
        %v1887 = vadd.f32 %v1726, %v1886
        %1888 = vmatmul.f32.gmra.mxu0 %v790
        %v1889 = vpop.f32.mrf.mxu0
        %v1890 = vadd.f32 %v1729, %v1889
        %1891 = vmatmul.f32.gmra.mxu0 %v794
        %v1892 = vpop.f32.mrf.mxu0
        %v1893 = vadd.f32 %v1732, %v1892
        %1894 = vmatmul.f32.gmra.mxu0 %v798
        %v1895 = vpop.f32.mrf.mxu0
        %v1896 = vadd.f32 %v1735, %v1895
        %1897 = vmatmul.f32.gmra.mxu0 %v802
        %v1898 = vpop.f32.mrf.mxu0
        %v1899 = vadd.f32 %v1738, %v1898
        %1900 = vmatmul.f32.gmra.mxu0 %v806
        %v1901 = vpop.f32.mrf.mxu0
        %v1902 = vadd.f32 %v1741, %v1901
        %1903 = vmatmul.f32.gmra.mxu0 %v810
        %v1904 = vpop.f32.mrf.mxu0
        %v1905 = vadd.f32 %v1744, %v1904
        %1906 = vmatmul.f32.gmra.mxu0 %v814
        %v1907 = vpop.f32.mrf.mxu0
        %v1908 = vadd.f32 %v1747, %v1907
        %1909 = vmatmul.f32.gmra.mxu0 %v818
        %v1910 = vpop.f32.mrf.mxu0
        %v1911 = vadd.f32 %v1750, %v1910
        %1912 = vmatmul.f32.gmra.mxu0 %v822
        %v1913 = vpop.f32.mrf.mxu0
        %v1914 = vadd.f32 %v1753, %v1913
        %1915 = vmatmul.f32.gmra.mxu0 %v826
        %v1916 = vpop.f32.mrf.mxu0
        %v1917 = vadd.f32 %v1756, %v1916
        %1918 = vmatmul.f32.gmra.mxu0 %v830
        %v1919 = vpop.f32.mrf.mxu0
        %v1920 = vadd.f32 %v1759, %v1919
        %1921 = vmatmul.f32.gmra.mxu0 %v834
        %v1922 = vpop.f32.mrf.mxu0
        %v1923 = vadd.f32 %v1762, %v1922
        %1924 = vmatmul.f32.gmra.mxu0 %v838
        %v1925 = vpop.f32.mrf.mxu0
        %v1926 = vadd.f32 %v1765, %v1925
        %1927 = vmatmul.f32.gmra.mxu0 %v842
        %v1928 = vpop.f32.mrf.mxu0
        %v1929 = vadd.f32 %v1768, %v1928
        %1930 = vmatmul.f32.gmra.mxu0 %v846
        %v1931 = vpop.f32.mrf.mxu0
        %v1932 = vadd.f32 %v1771, %v1931
        %1933 = vmatmul.f32.gmra.mxu0 %v850
        %v1934 = vpop.f32.mrf.mxu0
        %v1935 = vadd.f32 %v1774, %v1934
        %1936 = vmatmul.f32.gmra.mxu0 %v854
        %v1937 = vpop.f32.mrf.mxu0
        %v1938 = vadd.f32 %v1777, %v1937
        %1939 = vmatmul.f32.gmra.mxu0 %v858
        %v1940 = vpop.f32.mrf.mxu0
        %v1941 = vadd.f32 %v1780, %v1940
        %1942 = vmatmul.f32.gmra.mxu0 %v862
        %v1943 = vpop.f32.mrf.mxu0
        %v1944 = vadd.f32 %v1783, %v1943
        %1945 = vmatmul.f32.gmra.mxu0 %v866
        %v1946 = vpop.f32.mrf.mxu0
        %v1947 = vadd.f32 %v1786, %v1946
        %1948 = vmatmul.f32.gmra.mxu0 %v870
        %v1949 = vpop.f32.mrf.mxu0
        %v1950 = vadd.f32 %v1789, %v1949
        %1951 = vmatmul.f32.gmra.mxu0 %v874
        %v1952 = vpop.f32.mrf.mxu0
        %v1953 = vadd.f32 %v1792, %v1952
        %1954 = vmatmul.f32.gmra.mxu0 %v878
        %v1955 = vpop.f32.mrf.mxu0
        %v1956 = vadd.f32 %v1795, %v1955
        %1957 = vmatmul.f32.gmra.mxu0 %v882
        %v1958 = vpop.f32.mrf.mxu0
        %v1959 = vadd.f32 %v1798, %v1958
        %1960 = vmatmul.f32.gmra.mxu0 %v886
        %v1961 = vpop.f32.mrf.mxu0
        %v1962 = vadd.f32 %v1801, %v1961
        %1963 = vmatmul.f32.gmra.mxu0 %v890
        %v1964 = vpop.f32.mrf.mxu0
        %v1965 = vadd.f32 %v1804, %v1964
        %1966 = vmatmul.f32.gmra.mxu0 %v894
        %v1967 = vpop.f32.mrf.mxu0
        %v1968 = vadd.f32 %v1807, %v1967
        %1969 = vmatmul.f32.gmra.mxu0 %v898
        %v1970 = vpop.f32.mrf.mxu0
        %v1971 = vadd.f32 %v1810, %v1970
        %1972 = vmatmul.f32.gmra.mxu0 %v902
        %v1973 = vpop.f32.mrf.mxu0
        %v1974 = vadd.f32 %v1813, %v1973
        %1975 = vmatmul.f32.gmra.mxu0 %v906
        %v1976 = vpop.f32.mrf.mxu0
        %v1977 = vadd.f32 %v1816, %v1976
        %1978 = vmatmul.f32.gmra.mxu0 %v910
        %v1979 = vpop.f32.mrf.mxu0
        %v1980 = vadd.f32 %v1819, %v1979
        %1981 = vmatmul.f32.gmra.mxu0 %v914
        %v1982 = vpop.f32.mrf.mxu0
        %v1983 = vadd.f32 %v1822, %v1982
        %1984 = vmatmul.f32.gmra.mxu0 %v918
        %v1985 = vpop.f32.mrf.mxu0
        %v1986 = vadd.f32 %v1825, %v1985
        %1987 = vmatmul.f32.gmra.mxu0 %v922
        %v1988 = vpop.f32.mrf.mxu0
        %v1989 = vadd.f32 %v1828, %v1988
        %1990 = vmatmul.f32.gmra.mxu0 %v926
        %v1991 = vpop.f32.mrf.mxu0
        %v1992 = vadd.f32 %v1831, %v1991
        %1993 = vmatmul.f32.gmra.mxu0 %v930
        %v1994 = vpop.f32.mrf.mxu0
        %v1995 = vadd.f32 %v1834, %v1994
        %1996 = vmatmul.f32.gmra.mxu0 %v934
        %v1997 = vpop.f32.mrf.mxu0
        %v1998 = vadd.f32 %v1837, %v1997
        %1999 = vmatmul.f32.gmra.mxu0 %v938
        %v2000 = vpop.f32.mrf.mxu0
        %v2001 = vadd.f32 %v1840, %v2000
        %2002 = vmatmul.f32.gmra.mxu0 %v942
        %v2003 = vpop.f32.mrf.mxu0
        %v2004 = vadd.f32 %v1843, %v2003
        %2005 = vdwg.mxu0
        %2006 = vmatpush.msra.mxu0 %v992
        %2007 = vmatpush.msra.mxu0 %v991
        %2008 = vmatpush.msra.mxu0 %v990
        %2009 = vmatpush.msra.mxu0 %v989
        %2010 = vmatpush.msra.mxu0 %v988
        %2011 = vmatpush.msra.mxu0 %v987
        %2012 = vmatpush.msra.mxu0 %v986
        %2013 = vmatpush.msra.mxu0 %v985
        %2014 = vmatpush.msra.mxu0 %v984
        %2015 = vmatpush.msra.mxu0 %v983
        %2016 = vmatpush.msra.mxu0 %v982
        %2017 = vmatpush.msra.mxu0 %v981
        %2018 = vmatpush.msra.mxu0 %v980
        %2019 = vmatpush.msra.mxu0 %v979
        %2020 = vmatpush.msra.mxu0 %v978
        %2021 = vmatpush.msra.mxu0 %v977
        %2022 = vmatmul.f32.gmra.mxu0 %v755
        %v2023 = vpop.f32.mrf.mxu0
        %v2024 = vadd.f32 %v1863, %v2023
        %2025 = vmatmul.f32.gmra.mxu0 %v759
        %v2026 = vpop.f32.mrf.mxu0
        %v2027 = vadd.f32 %v1866, %v2026
        %2028 = vmatmul.f32.gmra.mxu0 %v763
        %v2029 = vpop.f32.mrf.mxu0
        %v2030 = vadd.f32 %v1869, %v2029
        %2031 = vmatmul.f32.gmra.mxu0 %v767
        %v2032 = vpop.f32.mrf.mxu0
        %v2033 = vadd.f32 %v1872, %v2032
        %2034 = vmatmul.f32.gmra.mxu0 %v771
        %v2035 = vpop.f32.mrf.mxu0
        %v2036 = vadd.f32 %v1875, %v2035
        %2037 = vmatmul.f32.gmra.mxu0 %v775
        %v2038 = vpop.f32.mrf.mxu0
        %v2039 = vadd.f32 %v1878, %v2038
        %2040 = vmatmul.f32.gmra.mxu0 %v779
        %v2041 = vpop.f32.mrf.mxu0
        %v2042 = vadd.f32 %v1881, %v2041
        %2043 = vmatmul.f32.gmra.mxu0 %v783
        %v2044 = vpop.f32.mrf.mxu0
        %v2045 = vadd.f32 %v1884, %v2044
        %2046 = vmatmul.f32.gmra.mxu0 %v787
        %v2047 = vpop.f32.mrf.mxu0
        %v2048 = vadd.f32 %v1887, %v2047
        %2049 = vmatmul.f32.gmra.mxu0 %v791
        %v2050 = vpop.f32.mrf.mxu0
        %v2051 = vadd.f32 %v1890, %v2050
        %2052 = vmatmul.f32.gmra.mxu0 %v795
        %v2053 = vpop.f32.mrf.mxu0
        %v2054 = vadd.f32 %v1893, %v2053
        %2055 = vmatmul.f32.gmra.mxu0 %v799
        %v2056 = vpop.f32.mrf.mxu0
        %v2057 = vadd.f32 %v1896, %v2056
        %2058 = vmatmul.f32.gmra.mxu0 %v803
        %v2059 = vpop.f32.mrf.mxu0
        %v2060 = vadd.f32 %v1899, %v2059
        %2061 = vmatmul.f32.gmra.mxu0 %v807
        %v2062 = vpop.f32.mrf.mxu0
        %v2063 = vadd.f32 %v1902, %v2062
        %2064 = vmatmul.f32.gmra.mxu0 %v811
        %v2065 = vpop.f32.mrf.mxu0
        %v2066 = vadd.f32 %v1905, %v2065
        %2067 = vmatmul.f32.gmra.mxu0 %v815
        %v2068 = vpop.f32.mrf.mxu0
        %v2069 = vadd.f32 %v1908, %v2068
        %2070 = vmatmul.f32.gmra.mxu0 %v819
        %v2071 = vpop.f32.mrf.mxu0
        %v2072 = vadd.f32 %v1911, %v2071
        %2073 = vmatmul.f32.gmra.mxu0 %v823
        %v2074 = vpop.f32.mrf.mxu0
        %v2075 = vadd.f32 %v1914, %v2074
        %2076 = vmatmul.f32.gmra.mxu0 %v827
        %v2077 = vpop.f32.mrf.mxu0
        %v2078 = vadd.f32 %v1917, %v2077
        %2079 = vmatmul.f32.gmra.mxu0 %v831
        %v2080 = vpop.f32.mrf.mxu0
        %v2081 = vadd.f32 %v1920, %v2080
        %2082 = vmatmul.f32.gmra.mxu0 %v835
        %v2083 = vpop.f32.mrf.mxu0
        %v2084 = vadd.f32 %v1923, %v2083
        %2085 = vmatmul.f32.gmra.mxu0 %v839
        %v2086 = vpop.f32.mrf.mxu0
        %v2087 = vadd.f32 %v1926, %v2086
        %2088 = vmatmul.f32.gmra.mxu0 %v843
        %v2089 = vpop.f32.mrf.mxu0
        %v2090 = vadd.f32 %v1929, %v2089
        %2091 = vmatmul.f32.gmra.mxu0 %v847
        %v2092 = vpop.f32.mrf.mxu0
        %v2093 = vadd.f32 %v1932, %v2092
        %2094 = vmatmul.f32.gmra.mxu0 %v851
        %v2095 = vpop.f32.mrf.mxu0
        %v2096 = vadd.f32 %v1935, %v2095
        %2097 = vmatmul.f32.gmra.mxu0 %v855
        %v2098 = vpop.f32.mrf.mxu0
        %v2099 = vadd.f32 %v1938, %v2098
        %2100 = vmatmul.f32.gmra.mxu0 %v859
        %v2101 = vpop.f32.mrf.mxu0
        %v2102 = vadd.f32 %v1941, %v2101
        %2103 = vmatmul.f32.gmra.mxu0 %v863
        %v2104 = vpop.f32.mrf.mxu0
        %v2105 = vadd.f32 %v1944, %v2104
        %2106 = vmatmul.f32.gmra.mxu0 %v867
        %v2107 = vpop.f32.mrf.mxu0
        %v2108 = vadd.f32 %v1947, %v2107
        %2109 = vmatmul.f32.gmra.mxu0 %v871
        %v2110 = vpop.f32.mrf.mxu0
        %v2111 = vadd.f32 %v1950, %v2110
        %2112 = vmatmul.f32.gmra.mxu0 %v875
        %v2113 = vpop.f32.mrf.mxu0
        %v2114 = vadd.f32 %v1953, %v2113
        %2115 = vmatmul.f32.gmra.mxu0 %v879
        %v2116 = vpop.f32.mrf.mxu0
        %v2117 = vadd.f32 %v1956, %v2116
        %2118 = vmatmul.f32.gmra.mxu0 %v883
        %v2119 = vpop.f32.mrf.mxu0
        %v2120 = vadd.f32 %v1959, %v2119
        %2121 = vmatmul.f32.gmra.mxu0 %v887
        %v2122 = vpop.f32.mrf.mxu0
        %v2123 = vadd.f32 %v1962, %v2122
        %2124 = vmatmul.f32.gmra.mxu0 %v891
        %v2125 = vpop.f32.mrf.mxu0
        %v2126 = vadd.f32 %v1965, %v2125
        %2127 = vmatmul.f32.gmra.mxu0 %v895
        %v2128 = vpop.f32.mrf.mxu0
        %v2129 = vadd.f32 %v1968, %v2128
        %2130 = vmatmul.f32.gmra.mxu0 %v899
        %v2131 = vpop.f32.mrf.mxu0
        %v2132 = vadd.f32 %v1971, %v2131
        %2133 = vmatmul.f32.gmra.mxu0 %v903
        %v2134 = vpop.f32.mrf.mxu0
        %v2135 = vadd.f32 %v1974, %v2134
        %2136 = vmatmul.f32.gmra.mxu0 %v907
        %v2137 = vpop.f32.mrf.mxu0
        %v2138 = vadd.f32 %v1977, %v2137
        %2139 = vmatmul.f32.gmra.mxu0 %v911
        %v2140 = vpop.f32.mrf.mxu0
        %v2141 = vadd.f32 %v1980, %v2140
        %2142 = vmatmul.f32.gmra.mxu0 %v915
        %v2143 = vpop.f32.mrf.mxu0
        %v2144 = vadd.f32 %v1983, %v2143
        %2145 = vmatmul.f32.gmra.mxu0 %v919
        %v2146 = vpop.f32.mrf.mxu0
        %v2147 = vadd.f32 %v1986, %v2146
        %2148 = vmatmul.f32.gmra.mxu0 %v923
        %v2149 = vpop.f32.mrf.mxu0
        %v2150 = vadd.f32 %v1989, %v2149
        %2151 = vmatmul.f32.gmra.mxu0 %v927
        %v2152 = vpop.f32.mrf.mxu0
        %v2153 = vadd.f32 %v1992, %v2152
        %2154 = vmatmul.f32.gmra.mxu0 %v931
        %v2155 = vpop.f32.mrf.mxu0
        %v2156 = vadd.f32 %v1995, %v2155
        %2157 = vmatmul.f32.gmra.mxu0 %v935
        %v2158 = vpop.f32.mrf.mxu0
        %v2159 = vadd.f32 %v1998, %v2158
        %2160 = vmatmul.f32.gmra.mxu0 %v939
        %v2161 = vpop.f32.mrf.mxu0
        %v2162 = vadd.f32 %v2001, %v2161
        %2163 = vmatmul.f32.gmra.mxu0 %v943
        %v2164 = vpop.f32.mrf.mxu0
        %v2165 = vadd.f32 %v2004, %v2164
        %2166 = vdwg.mxu0
        %2167 = vmatpush.msra.mxu0 %v1008
        %2168 = vmatpush.msra.mxu0 %v1007
        %2169 = vmatpush.msra.mxu0 %v1006
        %2170 = vmatpush.msra.mxu0 %v1005
        %2171 = vmatpush.msra.mxu0 %v1004
        %2172 = vmatpush.msra.mxu0 %v1003
        %2173 = vmatpush.msra.mxu0 %v1002
        %2174 = vmatpush.msra.mxu0 %v1001
        %2175 = vmatpush.msra.mxu0 %v1000
        %2176 = vmatpush.msra.mxu0 %v999
        %2177 = vmatpush.msra.mxu0 %v998
        %2178 = vmatpush.msra.mxu0 %v997
        %2179 = vmatpush.msra.mxu0 %v996
        %2180 = vmatpush.msra.mxu0 %v995
        %2181 = vmatpush.msra.mxu0 %v994
        %2182 = vmatpush.msra.mxu0 %v993
        %2183 = vmatmul.f32.gmra.mxu0 %v756
        %v2184 = vpop.f32.mrf.mxu0
        %v2185 = vadd.f32 %v2024, %v2184
        %2186 = vmatmul.f32.gmra.mxu0 %v760
        %v2187 = vpop.f32.mrf.mxu0
        %v2188 = vadd.f32 %v2027, %v2187
        %2189 = vmatmul.f32.gmra.mxu0 %v764
        %v2190 = vpop.f32.mrf.mxu0
        %v2191 = vadd.f32 %v2030, %v2190
        %2192 = vmatmul.f32.gmra.mxu0 %v768
        %v2193 = vpop.f32.mrf.mxu0
        %v2194 = vadd.f32 %v2033, %v2193
        %2195 = vmatmul.f32.gmra.mxu0 %v772
        %v2196 = vpop.f32.mrf.mxu0
        %v2197 = vadd.f32 %v2036, %v2196
        %2198 = vmatmul.f32.gmra.mxu0 %v776
        %v2199 = vpop.f32.mrf.mxu0
        %v2200 = vadd.f32 %v2039, %v2199
        %2201 = vmatmul.f32.gmra.mxu0 %v780
        %v2202 = vpop.f32.mrf.mxu0
        %v2203 = vadd.f32 %v2042, %v2202
        %2204 = vmatmul.f32.gmra.mxu0 %v784
        %v2205 = vpop.f32.mrf.mxu0
        %v2206 = vadd.f32 %v2045, %v2205
        %2207 = vmatmul.f32.gmra.mxu0 %v788
        %v2208 = vpop.f32.mrf.mxu0
        %v2209 = vadd.f32 %v2048, %v2208
        %2210 = vmatmul.f32.gmra.mxu0 %v792
        %v2211 = vpop.f32.mrf.mxu0
        %v2212 = vadd.f32 %v2051, %v2211
        %2213 = vmatmul.f32.gmra.mxu0 %v796
        %v2214 = vpop.f32.mrf.mxu0
        %v2215 = vadd.f32 %v2054, %v2214
        %2216 = vmatmul.f32.gmra.mxu0 %v800
        %v2217 = vpop.f32.mrf.mxu0
        %v2218 = vadd.f32 %v2057, %v2217
        %2219 = vmatmul.f32.gmra.mxu0 %v804
        %v2220 = vpop.f32.mrf.mxu0
        %v2221 = vadd.f32 %v2060, %v2220
        %2222 = vmatmul.f32.gmra.mxu0 %v808
        %v2223 = vpop.f32.mrf.mxu0
        %v2224 = vadd.f32 %v2063, %v2223
        %2225 = vmatmul.f32.gmra.mxu0 %v812
        %v2226 = vpop.f32.mrf.mxu0
        %v2227 = vadd.f32 %v2066, %v2226
        %2228 = vmatmul.f32.gmra.mxu0 %v816
        %v2229 = vpop.f32.mrf.mxu0
        %v2230 = vadd.f32 %v2069, %v2229
        %2231 = vmatmul.f32.gmra.mxu0 %v820
        %v2232 = vpop.f32.mrf.mxu0
        %v2233 = vadd.f32 %v2072, %v2232
        %2234 = vmatmul.f32.gmra.mxu0 %v824
        %v2235 = vpop.f32.mrf.mxu0
        %v2236 = vadd.f32 %v2075, %v2235
        %2237 = vmatmul.f32.gmra.mxu0 %v828
        %v2238 = vpop.f32.mrf.mxu0
        %v2239 = vadd.f32 %v2078, %v2238
        %2240 = vmatmul.f32.gmra.mxu0 %v832
        %v2241 = vpop.f32.mrf.mxu0
        %v2242 = vadd.f32 %v2081, %v2241
        %2243 = vmatmul.f32.gmra.mxu0 %v836
        %v2244 = vpop.f32.mrf.mxu0
        %v2245 = vadd.f32 %v2084, %v2244
        %2246 = vmatmul.f32.gmra.mxu0 %v840
        %v2247 = vpop.f32.mrf.mxu0
        %v2248 = vadd.f32 %v2087, %v2247
        %2249 = vmatmul.f32.gmra.mxu0 %v844
        %v2250 = vpop.f32.mrf.mxu0
        %v2251 = vadd.f32 %v2090, %v2250
        %2252 = vmatmul.f32.gmra.mxu0 %v848
        %v2253 = vpop.f32.mrf.mxu0
        %v2254 = vadd.f32 %v2093, %v2253
        %2255 = vmatmul.f32.gmra.mxu0 %v852
        %v2256 = vpop.f32.mrf.mxu0
        %v2257 = vadd.f32 %v2096, %v2256
        %2258 = vmatmul.f32.gmra.mxu0 %v856
        %v2259 = vpop.f32.mrf.mxu0
        %v2260 = vadd.f32 %v2099, %v2259
        %2261 = vmatmul.f32.gmra.mxu0 %v860
        %v2262 = vpop.f32.mrf.mxu0
        %v2263 = vadd.f32 %v2102, %v2262
        %2264 = vmatmul.f32.gmra.mxu0 %v864
        %v2265 = vpop.f32.mrf.mxu0
        %v2266 = vadd.f32 %v2105, %v2265
        %2267 = vmatmul.f32.gmra.mxu0 %v868
        %v2268 = vpop.f32.mrf.mxu0
        %v2269 = vadd.f32 %v2108, %v2268
        %2270 = vmatmul.f32.gmra.mxu0 %v872
        %v2271 = vpop.f32.mrf.mxu0
        %v2272 = vadd.f32 %v2111, %v2271
        %2273 = vmatmul.f32.gmra.mxu0 %v876
        %v2274 = vpop.f32.mrf.mxu0
        %v2275 = vadd.f32 %v2114, %v2274
        %2276 = vmatmul.f32.gmra.mxu0 %v880
        %v2277 = vpop.f32.mrf.mxu0
        %v2278 = vadd.f32 %v2117, %v2277
        %2279 = vmatmul.f32.gmra.mxu0 %v884
        %v2280 = vpop.f32.mrf.mxu0
        %v2281 = vadd.f32 %v2120, %v2280
        %2282 = vmatmul.f32.gmra.mxu0 %v888
        %v2283 = vpop.f32.mrf.mxu0
        %v2284 = vadd.f32 %v2123, %v2283
        %2285 = vmatmul.f32.gmra.mxu0 %v892
        %v2286 = vpop.f32.mrf.mxu0
        %v2287 = vadd.f32 %v2126, %v2286
        %2288 = vmatmul.f32.gmra.mxu0 %v896
        %v2289 = vpop.f32.mrf.mxu0
        %v2290 = vadd.f32 %v2129, %v2289
        %2291 = vmatmul.f32.gmra.mxu0 %v900
        %v2292 = vpop.f32.mrf.mxu0
        %v2293 = vadd.f32 %v2132, %v2292
        %2294 = vmatmul.f32.gmra.mxu0 %v904
        %v2295 = vpop.f32.mrf.mxu0
        %v2296 = vadd.f32 %v2135, %v2295
        %2297 = vmatmul.f32.gmra.mxu0 %v908
        %v2298 = vpop.f32.mrf.mxu0
        %v2299 = vadd.f32 %v2138, %v2298
        %2300 = vmatmul.f32.gmra.mxu0 %v912
        %v2301 = vpop.f32.mrf.mxu0
        %v2302 = vadd.f32 %v2141, %v2301
        %2303 = vmatmul.f32.gmra.mxu0 %v916
        %v2304 = vpop.f32.mrf.mxu0
        %v2305 = vadd.f32 %v2144, %v2304
        %2306 = vmatmul.f32.gmra.mxu0 %v920
        %v2307 = vpop.f32.mrf.mxu0
        %v2308 = vadd.f32 %v2147, %v2307
        %2309 = vmatmul.f32.gmra.mxu0 %v924
        %v2310 = vpop.f32.mrf.mxu0
        %v2311 = vadd.f32 %v2150, %v2310
        %2312 = vmatmul.f32.gmra.mxu0 %v928
        %v2313 = vpop.f32.mrf.mxu0
        %v2314 = vadd.f32 %v2153, %v2313
        %2315 = vmatmul.f32.gmra.mxu0 %v932
        %v2316 = vpop.f32.mrf.mxu0
        %v2317 = vadd.f32 %v2156, %v2316
        %2318 = vmatmul.f32.gmra.mxu0 %v936
        %v2319 = vpop.f32.mrf.mxu0
        %v2320 = vadd.f32 %v2159, %v2319
        %2321 = vmatmul.f32.gmra.mxu0 %v940
        %v2322 = vpop.f32.mrf.mxu0
        %v2323 = vadd.f32 %v2162, %v2322
        %2324 = vmatmul.f32.gmra.mxu0 %v944
        %v2325 = vpop.f32.mrf.mxu0
        %v2326 = vadd.f32 %v2165, %v2325
        %2327 = vdwg.mxu0
        %2328 = vst [vmem:[%s164] sm:$0xff] %v2185
        %2329 = vst [vmem:[%s164 + $0x8] sm:$0xff] %v2188
        %2330 = vst [vmem:[%s164 + $0x10] sm:$0xff] %v2191
        %2331 = vst [vmem:[%s164 + $0x18] sm:$0xff] %v2194
        %2332 = vst [vmem:[%s164 + $0x20] sm:$0xff] %v2197
        %2333 = vst [vmem:[%s164 + $0x28] sm:$0xff] %v2200
        %2334 = vst [vmem:[%s164 + $0x30] sm:$0xff] %v2203
        %2335 = vst [vmem:[%s164 + $0x38] sm:$0xff] %v2206
        %2336 = vst [vmem:[%s164 + $0x40] sm:$0xff] %v2209
        %2337 = vst [vmem:[%s164 + $0x48] sm:$0xff] %v2212
        %2338 = vst [vmem:[%s164 + $0x50] sm:$0xff] %v2215
        %2339 = vst [vmem:[%s164 + $0x58] sm:$0xff] %v2218
        %2340 = vst [vmem:[%s164 + $0x60] sm:$0xff] %v2221
        %2341 = vst [vmem:[%s164 + $0x68] sm:$0xff] %v2224
        %2342 = vst [vmem:[%s164 + $0x70] sm:$0xff] %v2227
        %2343 = vst [vmem:[%s164 + $0x78] sm:$0xff] %v2230
        %2344 = vst [vmem:[%s164 + $0x80] sm:$0xff] %v2233
        %2345 = vst [vmem:[%s164 + $0x88] sm:$0xff] %v2236
        %2346 = vst [vmem:[%s164 + $0x90] sm:$0xff] %v2239
        %2347 = vst [vmem:[%s164 + $0x98] sm:$0xff] %v2242
        %2348 = vst [vmem:[%s164 + $0xa0] sm:$0xff] %v2245
        %2349 = vst [vmem:[%s164 + $0xa8] sm:$0xff] %v2248
        %2350 = vst [vmem:[%s164 + $0xb0] sm:$0xff] %v2251
        %2351 = vst [vmem:[%s164 + $0xb8] sm:$0xff] %v2254
        %2352 = vst [vmem:[%s164 + $0xc0] sm:$0xff] %v2257
        %2353 = vst [vmem:[%s164 + $0xc8] sm:$0xff] %v2260
        %2354 = vst [vmem:[%s164 + $0xd0] sm:$0xff] %v2263
        %2355 = vst [vmem:[%s164 + $0xd8] sm:$0xff] %v2266
        %2356 = vst [vmem:[%s164 + $0xe0] sm:$0xff] %v2269
        %2357 = vst [vmem:[%s164 + $0xe8] sm:$0xff] %v2272
        %2358 = vst [vmem:[%s164 + $0xf0] sm:$0xff] %v2275
        %2359 = vst [vmem:[%s164 + $0xf8] sm:$0xff] %v2278
        %2360 = vst [vmem:[%s164 + $0x100] sm:$0xff] %v2281
        %2361 = vst [vmem:[%s164 + $0x108] sm:$0xff] %v2284
        %2362 = vst [vmem:[%s164 + $0x110] sm:$0xff] %v2287
        %2363 = vst [vmem:[%s164 + $0x118] sm:$0xff] %v2290
        %2364 = vst [vmem:[%s164 + $0x120] sm:$0xff] %v2293
        %2365 = vst [vmem:[%s164 + $0x128] sm:$0xff] %v2296
        %2366 = vst [vmem:[%s164 + $0x130] sm:$0xff] %v2299
        %2367 = vst [vmem:[%s164 + $0x138] sm:$0xff] %v2302
        %2368 = vst [vmem:[%s164 + $0x140] sm:$0xff] %v2305
        %2369 = vst [vmem:[%s164 + $0x148] sm:$0xff] %v2308
        %2370 = vst [vmem:[%s164 + $0x150] sm:$0xff] %v2311
        %2371 = vst [vmem:[%s164 + $0x158] sm:$0xff] %v2314
        %2372 = vst [vmem:[%s164 + $0x160] sm:$0xff] %v2317
        %2373 = vst [vmem:[%s164 + $0x168] sm:$0xff] %v2320
        %2374 = vst [vmem:[%s164 + $0x170] sm:$0xff] %v2323
        %2375 = vst [vmem:[%s164 + $0x178] sm:$0xff] %v2326
        %s2376 = sand.u32 %s93, 1
        %s2377 = scalar_lea.sflag [#allocation3], %s2376
        %s2378 = sand.u32 %s93, 1
        %s2379 = smul.addr %s2378, 384
        %s2380 = scalar_lea.vmem [#allocation2], %s2379
        // Predicated region
        $region33: #{tpu_custom_call.1} parent=31 // pred_check
          %p2381 = pneg %p103
        $region34: #{tpu_custom_call.1} parent=31 // pred_check_branch
          %2383 = sbr.rel (%p2381) target = $region36
        $region35: #{tpu_custom_call.1} parent=31 // pred_region
          %s2384 = smul.u32 48, %s17
          %2386 = vsyncadd %s2377, 0
          %s2387 = smul.addr %s2384, 8
          %s2388 = scalar_lea.hbm %s3, %s2387
          %s2389 = sshll.u32 %s2380, 4
          %s2390 = int_to_ptr.vmem [resolvable:$true] %s2389
          %s2391 = sshll.u32 %s2388, 4
          %s2392 = int_to_ptr.hbm [resolvable:$true] %s2391
          %2397 = dma.vmem_to_hbm [thread:$0]  %s2390, 6144, %s2392, %s2377, 128, 128, 8
        $region36: #{tpu_custom_call.1} parent=31 // pred_fallthru
          _
      $region32: #{tpu_custom_call.1} parent=5 // pred_fallthru
        _
      %p2398 = scmp.le.s32.totalorder 2, %s12
      // Predicated region
      $region37: #{tpu_custom_call.1} parent=5 // pred_check
        %p2399 = pneg %p2398
      $region38: #{tpu_custom_call.1} parent=5 // pred_check_branch
        %2401 = sbr.rel (%p2399) target = $region40
      $region39: #{tpu_custom_call.1} parent=5 // pred_region
        %s2402 = ssub.s32 %s12, 2
        // Predicated region
        $region41: #{tpu_custom_call.1} parent=39 // pred_check
          %p2403 = pneg %p109
        $region42: #{tpu_custom_call.1} parent=39 // pred_check_branch
          %2405 = sbr.rel (%p2403) target = $region44
        $region43: #{tpu_custom_call.1} parent=39 // pred_region
          %s2406 = sand.u32 %s94, 1
          %s2407 = scalar_lea.sflag [#allocation3], %s2406
          %s2408 = sand.u32 %s94, 1
          %s2409 = smul.addr %s2408, 384
          %s2410 = scalar_lea.vmem [#allocation2], %s2409
          %2412 = dma.done %s2407, 6144
        $region44: #{tpu_custom_call.1} parent=39 // pred_fallthru
          _
      $region40: #{tpu_custom_call.1} parent=5 // pred_fallthru
        _
    $region6: #{tpu_custom_call.1} parent=1 // loop_footer
      %s16 = sadd.s32 1, %s12
    $region7: #{tpu_custom_call.1} parent=1 // loop_footer_branch
      %11 = sbr.rel target = $region3
    $region8: #{tpu_custom_call.1} parent=1 // loop_exit
      _
    %2413 = vsyncpa [#allocation3], 1
    %s2414 = scalar_lea.sflag [#allocation3], 1
    %2415 = vsyncpa %s2414, 1

</llo_original>
